<compile_context>
chip_gen: v7x
topology: tpu7x:2x2x1
jax: 0.10.0
libtpu: 0.0.40
codegen_flags: <defaults>
</compile_context>

<pallas_src>
import functools

import jax
import jax.numpy as jnp
from jax.experimental import pallas as pl
from jax.experimental.pallas import tpu as pltpu  # noqa: F401  (TPU backend)


# ----------------------------------------------------------------------------
# In-kernel helpers (natural layout: rows on sublanes, coords/classes on lanes)
# ----------------------------------------------------------------------------
def _smooth_l1_elem(diff, sigma):
    """Elementwise smooth-L1 of an already-weighted |(x - t) * w| diff."""
    sigma2 = sigma * sigma
    quad = (diff < (1.0 / sigma2)).astype(jnp.float32)
    return quad * (0.5 * sigma2 * diff * diff) + (1.0 - quad) * (diff - 0.5 / sigma2)


def _cross_entropy_mean(logits, labels_col, ignore_index):
    """logits: (R, C) f32, labels_col: (R, 1) int32 -> (1, 1) mean NLL over valid rows."""
    m = jnp.max(logits, axis=1, keepdims=True)                                 # (R, 1)
    lse = m + jnp.log(jnp.sum(jnp.exp(logits - m), axis=1, keepdims=True))     # (R, 1)
    cls_iota = jax.lax.broadcasted_iota(jnp.int32, logits.shape, 1)            # (R, C)
    onehot = (cls_iota == labels_col).astype(jnp.float32)
    tgt = jnp.sum(onehot * logits, axis=1, keepdims=True)                      # (R, 1)
    valid = (labels_col != ignore_index).astype(jnp.float32)                   # (R, 1)
    total = jnp.sum((lse - tgt) * valid, axis=0, keepdims=True)                # (1, 1)
    count = jnp.maximum(jnp.sum(valid, axis=0, keepdims=True), 1.0)            # (1, 1)
    # EUP reciprocal (free bundle slot) instead of a VALU divide.
    return total * pl.reciprocal(count, approx=True)                           # (1, 1)


# ----------------------------------------------------------------------------
# Fused loss kernel.
# ----------------------------------------------------------------------------
def _fused_loss_kernel(rpn_loc_ref, gt_rpn_loc_ref, rpn_lbl_ref, rpn_score_ref,
                       roi_loc_ref, gt_roi_loc_ref, roi_lbl_ref, roi_score_ref,
                       out_ref, *, rpn_sigma, roi_sigma):
    # ---------------- RPN localization loss (weight = raw label, / S) -------
    rpn_lbl = rpn_lbl_ref[...]                                # (S, 1) int32
    w_rpn = rpn_lbl.astype(jnp.float32)                       # broadcast over 4 coord lanes
    rpn_diff = jnp.abs((rpn_loc_ref[...] - gt_rpn_loc_ref[...]) * w_rpn)   # (S, 4)
    s_rpn = rpn_loc_ref.shape[0]
    rpn_loc_loss = jnp.sum(_smooth_l1_elem(rpn_diff, rpn_sigma)) * (1.0 / s_rpn)

    # ---------------- RPN fg/bg cross-entropy (ignore_index=-1) -------------
    rpn_fg_loss = _cross_entropy_mean(rpn_score_ref[...], rpn_lbl, -1)     # (1, 1)

    # ---------------- RoI localization loss ----------------------------------
    # roi_loc_ref: (N, n_cls*4), lane l = class l//4, coordinate l%4.
    # Per-row class gather via 4 masked lane-reductions -> smooth-L1 runs only
    # on the selected (N, 1) coordinate columns (no full-block smooth-L1, no
    # gt replication across class groups).
    roi_lbl = roi_lbl_ref[...]                                # (N, 1) int32
    w_roi = roi_lbl.astype(jnp.float32)                       # raw label weight (spec)
    roi_loc = roi_loc_ref[...]                                # (N, n_cls*4)
    lane = jax.lax.broadcasted_iota(jnp.int32, roi_loc.shape, 1)
    base = roi_lbl * 4                                        # (N, 1)
    n_roi = roi_loc.shape[0]
    acc = 0.0
    for c in range(4):                                        # unrolled at trace time
        m_c = (lane == (base + c)).astype(jnp.float32)        # (N, n_cls*4) one-hot lane
        sel_c = jnp.sum(roi_loc * m_c, axis=1, keepdims=True)  # (N, 1) gathered coord
        d_c = jnp.abs((sel_c - gt_roi_loc_ref[:, c:c + 1]) * w_roi)
        acc = acc + jnp.sum(_smooth_l1_elem(d_c, roi_sigma))
    roi_loc_loss = acc * (1.0 / n_roi)

    # ---------------- RoI classification cross-entropy ----------------------
    roi_cls_loss = _cross_entropy_mean(roi_score_ref[...], roi_lbl, -1)    # (1, 1)

    # ---------------- Total + single lane-dense (1, 128) store --------------
    tot_loss = rpn_loc_loss + rpn_fg_loss + roi_loc_loss + roi_cls_loss
    lane_o = jax.lax.broadcasted_iota(jnp.int32, out_ref.shape, 1)         # (1, 128)
    out_ref[...] = (jnp.where(lane_o == 0, rpn_loc_loss, 0.0)
                    + jnp.where(lane_o == 1, rpn_fg_loss, 0.0)
                    + jnp.where(lane_o == 2, roi_loc_loss, 0.0)
                    + jnp.where(lane_o == 3, roi_cls_loss, 0.0)
                    + jnp.where(lane_o == 4, tot_loss, 0.0))


# ----------------------------------------------------------------------------
# Trainer.forward() loss aggregation: one fused Pallas call, no wrapper relayout.
# ----------------------------------------------------------------------------
@functools.partial(jax.jit, static_argnames=("rpn_sigma", "roi_sigma"))
def trainer_forward_losses(
    rpn_locs, rpn_scores, gt_rpn_locs, gt_rpn_labels,
    roi_loc_flat, roi_score, gt_roi_loc, gt_roi_label,
    *, rpn_sigma, roi_sigma,
):
    s_rpn = rpn_locs.shape[0]
    n_roi = roi_score.shape[0]
    n_cls = roi_score.shape[1]

    # Natural layouts go straight to the kernel.  The astype calls are no-ops
    # for f32/int32 callers; the label reshapes (S,)->(S,1) are metadata-only
    # bitcasts (same linear layout), so no extra XLA fusions / HBM copies.
    rpn_lbl = gt_rpn_labels.astype(jnp.int32).reshape(s_rpn, 1)
    roi_lbl = gt_roi_label.astype(jnp.int32).reshape(n_roi, 1)

    inputs = (
        rpn_locs.astype(jnp.float32),       # (S, 4)
        gt_rpn_locs.astype(jnp.float32),    # (S, 4)
        rpn_lbl,                            # (S, 1) int32
        rpn_scores.astype(jnp.float32),     # (S, 2)
        roi_loc_flat.astype(jnp.float32),   # (N, n_cls*4)
        gt_roi_loc.astype(jnp.float32),     # (N, 4)
        roi_lbl,                            # (N, 1) int32
        roi_score.astype(jnp.float32),      # (N, n_cls)
    )

    kernel = functools.partial(
        _fused_loss_kernel, rpn_sigma=float(rpn_sigma), roi_sigma=float(roi_sigma))

    # Advisory cost: tiny custom call -> let XLA schedule/overlap it freely.
    total_in = sum(int(x.size) for x in inputs)
    cost = pl.CostEstimate(
        flops=40 * total_in,
        transcendentals=s_rpn * 3 + n_roi * (n_cls + 1),
        bytes_accessed=4 * (total_in + 128),
    )

    out = pl.pallas_call(
        kernel,
        out_shape=jax.ShapeDtypeStruct((1, 128), jnp.float32),
        in_specs=[pl.BlockSpec(x.shape, lambda: (0, 0)) for x in inputs],
        out_specs=pl.BlockSpec((1, 128), lambda: (0, 0)),
        cost_estimate=cost,
    )(*inputs)

    return {
        "rpn_loc_loss": out[0, 0],
        "rpn_fg_loss": out[0, 1],
        "roi_loc_loss": out[0, 2],
        "roi_cls_loss": out[0, 3],
        "tot_loss": out[0, 4],
    }


# ----------------------------------------------------------------------------
# Pure-JAX references (for correctness check only).
# ----------------------------------------------------------------------------
def _ref_smooth_l1(x, t, w, sigma):
    sigma2 = sigma * sigma
    diff = jnp.abs((x - t) * w)
    smooth = (diff < 1.0 / sigma2).astype(jnp.float32)
    return jnp.sum(smooth * sigma2 * diff**2 / 2 + (1 - smooth) * (diff - 0.5 / sigma2))


def _ref_ce(logits, labels, ignore_index=-1):
    lse = jax.nn.logsumexp(logits, axis=-1)
    tgt = jnp.take_along_axis(logits, jnp.maximum(labels, 0)[:, None], axis=-1)[:, 0]
    valid = (labels != ignore_index).astype(jnp.float32)
    return jnp.sum((lse - tgt) * valid) / jnp.maximum(jnp.sum(valid), 1.0)


if __name__ == "__main__":
    key = jax.random.PRNGKey(0)
    ks = jax.random.split(key, 8)

    # Synthetic stand-ins for the (undefined) R-FCN submodule outputs.
    S_RPN = 128          # anchors
    N_ROI = 64           # sampled RoIs
    NUM_CLASSES = 8
    RPN_SIGMA, ROI_SIGMA = 3.0, 1.0

    rpn_locs = jax.random.normal(ks[0], (S_RPN, 4), jnp.float32)
    gt_rpn_locs = jax.random.normal(ks[1], (S_RPN, 4), jnp.float32)
    gt_rpn_labels = jax.random.randint(ks[2], (S_RPN,), -1, 2, jnp.int32)   # {-1,0,1}
    rpn_scores = jax.random.normal(ks[3], (S_RPN, 2), jnp.float32)

    roi_loc_flat = jax.random.normal(ks[4], (N_ROI, NUM_CLASSES * 4), jnp.float32)
    roi_score = jax.random.normal(ks[5], (N_ROI, NUM_CLASSES), jnp.float32)
    gt_roi_loc = jax.random.normal(ks[6], (N_ROI, 4), jnp.float32)
    gt_roi_label = jax.random.randint(ks[7], (N_ROI,), 0, NUM_CLASSES, jnp.int32)

    losses = trainer_forward_losses(
        rpn_locs, rpn_scores, gt_rpn_locs, gt_rpn_labels,
        roi_loc_flat, roi_score, gt_roi_loc, gt_roi_label,
        rpn_sigma=RPN_SIGMA, roi_sigma=ROI_SIGMA,
    )
    losses = {k: jax.block_until_ready(v) for k, v in losses.items()}

    # Reference check (tolerance accounts for the approx EUP reciprocal).
    w_rpn = jnp.broadcast_to(gt_rpn_labels.astype(jnp.float32)[:, None], (S_RPN, 4))
    ref_rpn_loc = _ref_smooth_l1(rpn_locs, gt_rpn_locs, w_rpn, RPN_SIGMA) / S_RPN
    ref_rpn_fg = _ref_ce(rpn_scores, gt_rpn_labels, ignore_index=-1)
    roi_loc_sel = roi_loc_flat.reshape(N_ROI, NUM_CLASSES, 4)[jnp.arange(N_ROI), gt_roi_label]
    w_roi = jnp.broadcast_to(gt_roi_label.astype(jnp.float32)[:, None], (N_ROI, 4))
    ref_roi_loc = _ref_smooth_l1(roi_loc_sel, gt_roi_loc, w_roi, ROI_SIGMA) / N_ROI
    ref_roi_cls = _ref_ce(roi_score, gt_roi_label)
    ref_tot = ref_rpn_loc + ref_rpn_fg + ref_roi_loc + ref_roi_cls

    assert jnp.allclose(losses["rpn_loc_loss"], ref_rpn_loc, rtol=1e-3, atol=1e-3)
    assert jnp.allclose(losses["rpn_fg_loss"], ref_rpn_fg, rtol=1e-3, atol=1e-3)
    assert jnp.allclose(losses["roi_loc_loss"], ref_roi_loc, rtol=1e-3, atol=1e-3)
    assert jnp.allclose(losses["roi_cls_loss"], ref_roi_cls, rtol=1e-3, atol=1e-3)
    assert jnp.allclose(losses["tot_loss"], ref_tot, rtol=1e-3, atol=1e-3)

    print("KERNEL_OK")
</pallas_src>

<mosaic_0001>
module attributes {stable_mosaic.version = 11 : i64} {
  func.func @_fused_loss_kernel(%arg0: memref<128x4xf32, #tpu.memory_space<vmem>>, %arg1: memref<128x4xf32, #tpu.memory_space<vmem>>, %arg2: memref<128x1xi32, #tpu.memory_space<vmem>>, %arg3: memref<128x2xf32, #tpu.memory_space<vmem>>, %arg4: memref<64x32xf32, #tpu.memory_space<vmem>>, %arg5: memref<64x4xf32, #tpu.memory_space<vmem>>, %arg6: memref<64x1xi32, #tpu.memory_space<vmem>>, %arg7: memref<64x8xf32, #tpu.memory_space<vmem>>, %arg8: memref<1x128xf32, #tpu.memory_space<vmem>>) attributes {dimension_semantics = [], scalar_prefetch = 0 : i64, scratch_operands = 0 : i64, tpu.core_type = #tpu.core_type<tc>} {
    %c0 = arith.constant 0 : index
    %c0_0 = arith.constant 0 : index
    %0 = vector.load %arg2[%c0, %c0_0] : memref<128x1xi32, #tpu.memory_space<vmem>>, vector<128x1xi32>
    %1 = arith.sitofp %0 : vector<128x1xi32> to vector<128x1xf32>
    %c0_1 = arith.constant 0 : index
    %c0_2 = arith.constant 0 : index
    %2 = vector.load %arg0[%c0_1, %c0_2] : memref<128x4xf32, #tpu.memory_space<vmem>>, vector<128x4xf32>
    %c0_3 = arith.constant 0 : index
    %c0_4 = arith.constant 0 : index
    %3 = vector.load %arg1[%c0_3, %c0_4] : memref<128x4xf32, #tpu.memory_space<vmem>>, vector<128x4xf32>
    %4 = arith.subf %2, %3 : vector<128x4xf32>
    %5 = vector.broadcast %1 : vector<128x1xf32> to vector<128x4xf32>
    %6 = arith.mulf %4, %5 : vector<128x4xf32>
    %7 = math.absf %6 : vector<128x4xf32>
    %cst = arith.constant 0.111111112 : f32
    %8 = vector.broadcast %cst : f32 to vector<128x4xf32>
    %9 = arith.cmpf olt, %7, %8 : vector<128x4xf32>
    %10 = arith.extui %9 : vector<128x4xi1> to vector<128x4xi32>
    %11 = arith.sitofp %10 : vector<128x4xi32> to vector<128x4xf32>
    %cst_5 = arith.constant 4.500000e+00 : f32
    %12 = vector.broadcast %cst_5 : f32 to vector<128x4xf32>
    %13 = arith.mulf %12, %7 : vector<128x4xf32>
    %14 = arith.mulf %13, %7 : vector<128x4xf32>
    %15 = arith.mulf %11, %14 : vector<128x4xf32>
    %cst_6 = arith.constant 1.000000e+00 : f32
    %16 = vector.broadcast %cst_6 : f32 to vector<128x4xf32>
    %17 = arith.subf %16, %11 : vector<128x4xf32>
    %cst_7 = arith.constant 0.055555556 : f32
    %18 = vector.broadcast %cst_7 : f32 to vector<128x4xf32>
    %19 = arith.subf %7, %18 : vector<128x4xf32>
    %20 = arith.mulf %17, %19 : vector<128x4xf32>
    %21 = arith.addf %15, %20 : vector<128x4xf32>
    %22 = vector.shape_cast %21 : vector<128x4xf32> to vector<1x128x4xf32>
    %cst_8 = arith.constant dense<0.000000e+00> : vector<1xf32>
    %23 = vector.multi_reduction <add>, %22, %cst_8 [1, 2] : vector<1x128x4xf32> to vector<1xf32>
    %24 = vector.shape_cast %23 : vector<1xf32> to vector<1x1x1xf32>
    %25 = vector.extract %24[0, 0, 0] : f32 from vector<1x1x1xf32>
    %cst_9 = arith.constant 7.812500e-03 : f32
    %26 = arith.mulf %25, %cst_9 : f32
    %c0_10 = arith.constant 0 : index
    %c0_11 = arith.constant 0 : index
    %27 = vector.load %arg3[%c0_10, %c0_11] : memref<128x2xf32, #tpu.memory_space<vmem>>, vector<128x2xf32>
    %cst_12 = arith.constant dense<0xFF800000> : vector<128xf32>
    %28 = vector.multi_reduction <maximumf>, %27, %cst_12 [1] : vector<128x2xf32> to vector<128xf32>
    %29 = vector.shape_cast %28 : vector<128xf32> to vector<128x1xf32>
    %30 = vector.broadcast %29 : vector<128x1xf32> to vector<128x2xf32>
    %31 = arith.subf %27, %30 : vector<128x2xf32>
    %32 = math.exp %31 : vector<128x2xf32>
    %cst_13 = arith.constant dense<0.000000e+00> : vector<128xf32>
    %33 = vector.multi_reduction <add>, %32, %cst_13 [1] : vector<128x2xf32> to vector<128xf32>
    %34 = vector.shape_cast %33 : vector<128xf32> to vector<128x1xf32>
    %35 = math.log %34 : vector<128x1xf32>
    %36 = arith.addf %29, %35 : vector<128x1xf32>
    %37 = tpu.iota {dimensions = array<i32: 1>} : vector<128x2xi32>
    %38 = vector.broadcast %0 : vector<128x1xi32> to vector<128x2xi32>
    %39 = arith.cmpi eq, %37, %38 : vector<128x2xi32>
    %40 = arith.extui %39 : vector<128x2xi1> to vector<128x2xi32>
    %41 = arith.sitofp %40 : vector<128x2xi32> to vector<128x2xf32>
    %42 = arith.mulf %41, %27 : vector<128x2xf32>
    %cst_14 = arith.constant dense<0.000000e+00> : vector<128xf32>
    %43 = vector.multi_reduction <add>, %42, %cst_14 [1] : vector<128x2xf32> to vector<128xf32>
    %44 = vector.shape_cast %43 : vector<128xf32> to vector<128x1xf32>
    %c-1_i32 = arith.constant -1 : i32
    %45 = vector.broadcast %c-1_i32 : i32 to vector<128x1xi32>
    %46 = arith.cmpi ne, %0, %45 : vector<128x1xi32>
    %47 = arith.extui %46 : vector<128x1xi1> to vector<128x1xi32>
    %48 = arith.sitofp %47 : vector<128x1xi32> to vector<128x1xf32>
    %49 = arith.subf %36, %44 : vector<128x1xf32>
    %50 = arith.mulf %49, %48 : vector<128x1xf32>
    %cst_15 = arith.constant dense<0.000000e+00> : vector<1xf32>
    %51 = vector.multi_reduction <add>, %50, %cst_15 [0] : vector<128x1xf32> to vector<1xf32>
    %52 = vector.shape_cast %51 : vector<1xf32> to vector<1x1xf32>
    %cst_16 = arith.constant dense<0.000000e+00> : vector<1xf32>
    %53 = vector.multi_reduction <add>, %48, %cst_16 [0] : vector<128x1xf32> to vector<1xf32>
    %54 = vector.shape_cast %53 : vector<1xf32> to vector<1x1xf32>
    %cst_17 = arith.constant 1.000000e+00 : f32
    %55 = vector.broadcast %cst_17 : f32 to vector<1x1xf32>
    %56 = arith.maximumf %54, %55 : vector<1x1xf32>
    %57 = tpu.reciprocal %56 {approx = true} : vector<1x1xf32> -> vector<1x1xf32>
    %58 = arith.mulf %52, %57 : vector<1x1xf32>
    %c0_18 = arith.constant 0 : index
    %c0_19 = arith.constant 0 : index
    %59 = vector.load %arg6[%c0_18, %c0_19] : memref<64x1xi32, #tpu.memory_space<vmem>>, vector<64x1xi32>
    %60 = arith.sitofp %59 : vector<64x1xi32> to vector<64x1xf32>
    %c0_20 = arith.constant 0 : index
    %c0_21 = arith.constant 0 : index
    %61 = vector.load %arg4[%c0_20, %c0_21] : memref<64x32xf32, #tpu.memory_space<vmem>>, vector<64x32xf32>
    %62 = tpu.iota {dimensions = array<i32: 1>} : vector<64x32xi32>
    %c4_i32 = arith.constant 4 : i32
    %63 = vector.broadcast %c4_i32 : i32 to vector<64x1xi32>
    %64 = arith.muli %59, %63 : vector<64x1xi32>
    %c0_i32 = arith.constant 0 : i32
    %65 = vector.broadcast %c0_i32 : i32 to vector<64x1xi32>
    %66 = arith.addi %64, %65 : vector<64x1xi32>
    %67 = vector.broadcast %66 : vector<64x1xi32> to vector<64x32xi32>
    %68 = arith.cmpi eq, %62, %67 : vector<64x32xi32>
    %69 = arith.extui %68 : vector<64x32xi1> to vector<64x32xi32>
    %70 = arith.sitofp %69 : vector<64x32xi32> to vector<64x32xf32>
    %71 = arith.mulf %61, %70 : vector<64x32xf32>
    %cst_22 = arith.constant dense<0.000000e+00> : vector<64xf32>
    %72 = vector.multi_reduction <add>, %71, %cst_22 [1] : vector<64x32xf32> to vector<64xf32>
    %73 = vector.shape_cast %72 : vector<64xf32> to vector<64x1xf32>
    %c0_23 = arith.constant 0 : index
    %c0_24 = arith.constant 0 : index
    %74 = vector.load %arg5[%c0_23, %c0_24] : memref<64x4xf32, #tpu.memory_space<vmem>>, vector<64x1xf32>
    %75 = arith.subf %73, %74 : vector<64x1xf32>
    %76 = arith.mulf %75, %60 : vector<64x1xf32>
    %77 = math.absf %76 : vector<64x1xf32>
    %cst_25 = arith.constant 1.000000e+00 : f32
    %78 = vector.broadcast %cst_25 : f32 to vector<64x1xf32>
    %79 = arith.cmpf olt, %77, %78 : vector<64x1xf32>
    %80 = arith.extui %79 : vector<64x1xi1> to vector<64x1xi32>
    %81 = arith.sitofp %80 : vector<64x1xi32> to vector<64x1xf32>
    %cst_26 = arith.constant 5.000000e-01 : f32
    %82 = vector.broadcast %cst_26 : f32 to vector<64x1xf32>
    %83 = arith.mulf %82, %77 : vector<64x1xf32>
    %84 = arith.mulf %83, %77 : vector<64x1xf32>
    %85 = arith.mulf %81, %84 : vector<64x1xf32>
    %cst_27 = arith.constant 1.000000e+00 : f32
    %86 = vector.broadcast %cst_27 : f32 to vector<64x1xf32>
    %87 = arith.subf %86, %81 : vector<64x1xf32>
    %cst_28 = arith.constant 5.000000e-01 : f32
    %88 = vector.broadcast %cst_28 : f32 to vector<64x1xf32>
    %89 = arith.subf %77, %88 : vector<64x1xf32>
    %90 = arith.mulf %87, %89 : vector<64x1xf32>
    %91 = arith.addf %85, %90 : vector<64x1xf32>
    %92 = vector.shape_cast %91 : vector<64x1xf32> to vector<1x64x1xf32>
    %cst_29 = arith.constant dense<0.000000e+00> : vector<1xf32>
    %93 = vector.multi_reduction <add>, %92, %cst_29 [1, 2] : vector<1x64x1xf32> to vector<1xf32>
    %94 = vector.shape_cast %93 : vector<1xf32> to vector<1x1x1xf32>
    %95 = vector.extract %94[0, 0, 0] : f32 from vector<1x1x1xf32>
    %cst_30 = arith.constant 0.000000e+00 : f32
    %96 = arith.addf %cst_30, %95 : f32
    %c1_i32 = arith.constant 1 : i32
    %97 = vector.broadcast %c1_i32 : i32 to vector<64x1xi32>
    %98 = arith.addi %64, %97 : vector<64x1xi32>
    %99 = vector.broadcast %98 : vector<64x1xi32> to vector<64x32xi32>
    %100 = arith.cmpi eq, %62, %99 : vector<64x32xi32>
    %101 = arith.extui %100 : vector<64x32xi1> to vector<64x32xi32>
    %102 = arith.sitofp %101 : vector<64x32xi32> to vector<64x32xf32>
    %103 = arith.mulf %61, %102 : vector<64x32xf32>
    %cst_31 = arith.constant dense<0.000000e+00> : vector<64xf32>
    %104 = vector.multi_reduction <add>, %103, %cst_31 [1] : vector<64x32xf32> to vector<64xf32>
    %105 = vector.shape_cast %104 : vector<64xf32> to vector<64x1xf32>
    %c0_32 = arith.constant 0 : index
    %c1 = arith.constant 1 : index
    %106 = vector.load %arg5[%c0_32, %c1] : memref<64x4xf32, #tpu.memory_space<vmem>>, vector<64x1xf32>
    %107 = arith.subf %105, %106 : vector<64x1xf32>
    %108 = arith.mulf %107, %60 : vector<64x1xf32>
    %109 = math.absf %108 : vector<64x1xf32>
    %cst_33 = arith.constant 1.000000e+00 : f32
    %110 = vector.broadcast %cst_33 : f32 to vector<64x1xf32>
    %111 = arith.cmpf olt, %109, %110 : vector<64x1xf32>
    %112 = arith.extui %111 : vector<64x1xi1> to vector<64x1xi32>
    %113 = arith.sitofp %112 : vector<64x1xi32> to vector<64x1xf32>
    %cst_34 = arith.constant 5.000000e-01 : f32
    %114 = vector.broadcast %cst_34 : f32 to vector<64x1xf32>
    %115 = arith.mulf %114, %109 : vector<64x1xf32>
    %116 = arith.mulf %115, %109 : vector<64x1xf32>
    %117 = arith.mulf %113, %116 : vector<64x1xf32>
    %cst_35 = arith.constant 1.000000e+00 : f32
    %118 = vector.broadcast %cst_35 : f32 to vector<64x1xf32>
    %119 = arith.subf %118, %113 : vector<64x1xf32>
    %cst_36 = arith.constant 5.000000e-01 : f32
    %120 = vector.broadcast %cst_36 : f32 to vector<64x1xf32>
    %121 = arith.subf %109, %120 : vector<64x1xf32>
    %122 = arith.mulf %119, %121 : vector<64x1xf32>
    %123 = arith.addf %117, %122 : vector<64x1xf32>
    %124 = vector.shape_cast %123 : vector<64x1xf32> to vector<1x64x1xf32>
    %cst_37 = arith.constant dense<0.000000e+00> : vector<1xf32>
    %125 = vector.multi_reduction <add>, %124, %cst_37 [1, 2] : vector<1x64x1xf32> to vector<1xf32>
    %126 = vector.shape_cast %125 : vector<1xf32> to vector<1x1x1xf32>
    %127 = vector.extract %126[0, 0, 0] : f32 from vector<1x1x1xf32>
    %128 = arith.addf %96, %127 : f32
    %c2_i32 = arith.constant 2 : i32
    %129 = vector.broadcast %c2_i32 : i32 to vector<64x1xi32>
    %130 = arith.addi %64, %129 : vector<64x1xi32>
    %131 = vector.broadcast %130 : vector<64x1xi32> to vector<64x32xi32>
    %132 = arith.cmpi eq, %62, %131 : vector<64x32xi32>
    %133 = arith.extui %132 : vector<64x32xi1> to vector<64x32xi32>
    %134 = arith.sitofp %133 : vector<64x32xi32> to vector<64x32xf32>
    %135 = arith.mulf %61, %134 : vector<64x32xf32>
    %cst_38 = arith.constant dense<0.000000e+00> : vector<64xf32>
    %136 = vector.multi_reduction <add>, %135, %cst_38 [1] : vector<64x32xf32> to vector<64xf32>
    %137 = vector.shape_cast %136 : vector<64xf32> to vector<64x1xf32>
    %c0_39 = arith.constant 0 : index
    %c2 = arith.constant 2 : index
    %138 = vector.load %arg5[%c0_39, %c2] : memref<64x4xf32, #tpu.memory_space<vmem>>, vector<64x1xf32>
    %139 = arith.subf %137, %138 : vector<64x1xf32>
    %140 = arith.mulf %139, %60 : vector<64x1xf32>
    %141 = math.absf %140 : vector<64x1xf32>
    %cst_40 = arith.constant 1.000000e+00 : f32
    %142 = vector.broadcast %cst_40 : f32 to vector<64x1xf32>
    %143 = arith.cmpf olt, %141, %142 : vector<64x1xf32>
    %144 = arith.extui %143 : vector<64x1xi1> to vector<64x1xi32>
    %145 = arith.sitofp %144 : vector<64x1xi32> to vector<64x1xf32>
    %cst_41 = arith.constant 5.000000e-01 : f32
    %146 = vector.broadcast %cst_41 : f32 to vector<64x1xf32>
    %147 = arith.mulf %146, %141 : vector<64x1xf32>
    %148 = arith.mulf %147, %141 : vector<64x1xf32>
    %149 = arith.mulf %145, %148 : vector<64x1xf32>
    %cst_42 = arith.constant 1.000000e+00 : f32
    %150 = vector.broadcast %cst_42 : f32 to vector<64x1xf32>
    %151 = arith.subf %150, %145 : vector<64x1xf32>
    %cst_43 = arith.constant 5.000000e-01 : f32
    %152 = vector.broadcast %cst_43 : f32 to vector<64x1xf32>
    %153 = arith.subf %141, %152 : vector<64x1xf32>
    %154 = arith.mulf %151, %153 : vector<64x1xf32>
    %155 = arith.addf %149, %154 : vector<64x1xf32>
    %156 = vector.shape_cast %155 : vector<64x1xf32> to vector<1x64x1xf32>
    %cst_44 = arith.constant dense<0.000000e+00> : vector<1xf32>
    %157 = vector.multi_reduction <add>, %156, %cst_44 [1, 2] : vector<1x64x1xf32> to vector<1xf32>
    %158 = vector.shape_cast %157 : vector<1xf32> to vector<1x1x1xf32>
    %159 = vector.extract %158[0, 0, 0] : f32 from vector<1x1x1xf32>
    %160 = arith.addf %128, %159 : f32
    %c3_i32 = arith.constant 3 : i32
    %161 = vector.broadcast %c3_i32 : i32 to vector<64x1xi32>
    %162 = arith.addi %64, %161 : vector<64x1xi32>
    %163 = vector.broadcast %162 : vector<64x1xi32> to vector<64x32xi32>
    %164 = arith.cmpi eq, %62, %163 : vector<64x32xi32>
    %165 = arith.extui %164 : vector<64x32xi1> to vector<64x32xi32>
    %166 = arith.sitofp %165 : vector<64x32xi32> to vector<64x32xf32>
    %167 = arith.mulf %61, %166 : vector<64x32xf32>
    %cst_45 = arith.constant dense<0.000000e+00> : vector<64xf32>
    %168 = vector.multi_reduction <add>, %167, %cst_45 [1] : vector<64x32xf32> to vector<64xf32>
    %169 = vector.shape_cast %168 : vector<64xf32> to vector<64x1xf32>
    %c0_46 = arith.constant 0 : index
    %c3 = arith.constant 3 : index
    %170 = vector.load %arg5[%c0_46, %c3] : memref<64x4xf32, #tpu.memory_space<vmem>>, vector<64x1xf32>
    %171 = arith.subf %169, %170 : vector<64x1xf32>
    %172 = arith.mulf %171, %60 : vector<64x1xf32>
    %173 = math.absf %172 : vector<64x1xf32>
    %cst_47 = arith.constant 1.000000e+00 : f32
    %174 = vector.broadcast %cst_47 : f32 to vector<64x1xf32>
    %175 = arith.cmpf olt, %173, %174 : vector<64x1xf32>
    %176 = arith.extui %175 : vector<64x1xi1> to vector<64x1xi32>
    %177 = arith.sitofp %176 : vector<64x1xi32> to vector<64x1xf32>
    %cst_48 = arith.constant 5.000000e-01 : f32
    %178 = vector.broadcast %cst_48 : f32 to vector<64x1xf32>
    %179 = arith.mulf %178, %173 : vector<64x1xf32>
    %180 = arith.mulf %179, %173 : vector<64x1xf32>
    %181 = arith.mulf %177, %180 : vector<64x1xf32>
    %cst_49 = arith.constant 1.000000e+00 : f32
    %182 = vector.broadcast %cst_49 : f32 to vector<64x1xf32>
    %183 = arith.subf %182, %177 : vector<64x1xf32>
    %cst_50 = arith.constant 5.000000e-01 : f32
    %184 = vector.broadcast %cst_50 : f32 to vector<64x1xf32>
    %185 = arith.subf %173, %184 : vector<64x1xf32>
    %186 = arith.mulf %183, %185 : vector<64x1xf32>
    %187 = arith.addf %181, %186 : vector<64x1xf32>
    %188 = vector.shape_cast %187 : vector<64x1xf32> to vector<1x64x1xf32>
    %cst_51 = arith.constant dense<0.000000e+00> : vector<1xf32>
    %189 = vector.multi_reduction <add>, %188, %cst_51 [1, 2] : vector<1x64x1xf32> to vector<1xf32>
    %190 = vector.shape_cast %189 : vector<1xf32> to vector<1x1x1xf32>
    %191 = vector.extract %190[0, 0, 0] : f32 from vector<1x1x1xf32>
    %192 = arith.addf %160, %191 : f32
    %cst_52 = arith.constant 1.562500e-02 : f32
    %193 = arith.mulf %192, %cst_52 : f32
    %c0_53 = arith.constant 0 : index
    %c0_54 = arith.constant 0 : index
    %194 = vector.load %arg7[%c0_53, %c0_54] : memref<64x8xf32, #tpu.memory_space<vmem>>, vector<64x8xf32>
    %cst_55 = arith.constant dense<0xFF800000> : vector<64xf32>
    %195 = vector.multi_reduction <maximumf>, %194, %cst_55 [1] : vector<64x8xf32> to vector<64xf32>
    %196 = vector.shape_cast %195 : vector<64xf32> to vector<64x1xf32>
    %197 = vector.broadcast %196 : vector<64x1xf32> to vector<64x8xf32>
    %198 = arith.subf %194, %197 : vector<64x8xf32>
    %199 = math.exp %198 : vector<64x8xf32>
    %cst_56 = arith.constant dense<0.000000e+00> : vector<64xf32>
    %200 = vector.multi_reduction <add>, %199, %cst_56 [1] : vector<64x8xf32> to vector<64xf32>
    %201 = vector.shape_cast %200 : vector<64xf32> to vector<64x1xf32>
    %202 = math.log %201 : vector<64x1xf32>
    %203 = arith.addf %196, %202 : vector<64x1xf32>
    %204 = tpu.iota {dimensions = array<i32: 1>} : vector<64x8xi32>
    %205 = vector.broadcast %59 : vector<64x1xi32> to vector<64x8xi32>
    %206 = arith.cmpi eq, %204, %205 : vector<64x8xi32>
    %207 = arith.extui %206 : vector<64x8xi1> to vector<64x8xi32>
    %208 = arith.sitofp %207 : vector<64x8xi32> to vector<64x8xf32>
    %209 = arith.mulf %208, %194 : vector<64x8xf32>
    %cst_57 = arith.constant dense<0.000000e+00> : vector<64xf32>
    %210 = vector.multi_reduction <add>, %209, %cst_57 [1] : vector<64x8xf32> to vector<64xf32>
    %211 = vector.shape_cast %210 : vector<64xf32> to vector<64x1xf32>
    %c-1_i32_58 = arith.constant -1 : i32
    %212 = vector.broadcast %c-1_i32_58 : i32 to vector<64x1xi32>
    %213 = arith.cmpi ne, %59, %212 : vector<64x1xi32>
    %214 = arith.extui %213 : vector<64x1xi1> to vector<64x1xi32>
    %215 = arith.sitofp %214 : vector<64x1xi32> to vector<64x1xf32>
    %216 = arith.subf %203, %211 : vector<64x1xf32>
    %217 = arith.mulf %216, %215 : vector<64x1xf32>
    %cst_59 = arith.constant dense<0.000000e+00> : vector<1xf32>
    %218 = vector.multi_reduction <add>, %217, %cst_59 [0] : vector<64x1xf32> to vector<1xf32>
    %219 = vector.shape_cast %218 : vector<1xf32> to vector<1x1xf32>
    %cst_60 = arith.constant dense<0.000000e+00> : vector<1xf32>
    %220 = vector.multi_reduction <add>, %215, %cst_60 [0] : vector<64x1xf32> to vector<1xf32>
    %221 = vector.shape_cast %220 : vector<1xf32> to vector<1x1xf32>
    %cst_61 = arith.constant 1.000000e+00 : f32
    %222 = vector.broadcast %cst_61 : f32 to vector<1x1xf32>
    %223 = arith.maximumf %221, %222 : vector<1x1xf32>
    %224 = tpu.reciprocal %223 {approx = true} : vector<1x1xf32> -> vector<1x1xf32>
    %225 = arith.mulf %219, %224 : vector<1x1xf32>
    %226 = vector.broadcast %26 : f32 to vector<1x1xf32>
    %227 = arith.addf %226, %58 : vector<1x1xf32>
    %228 = vector.broadcast %193 : f32 to vector<1x1xf32>
    %229 = arith.addf %227, %228 : vector<1x1xf32>
    %230 = arith.addf %229, %225 : vector<1x1xf32>
    %231 = tpu.iota {dimensions = array<i32: 1>} : vector<1x128xi32>
    %c0_i32_62 = arith.constant 0 : i32
    %232 = vector.broadcast %c0_i32_62 : i32 to vector<1x128xi32>
    %233 = arith.cmpi eq, %231, %232 : vector<1x128xi32>
    %cst_63 = arith.constant 0.000000e+00 : f32
    %234 = vector.broadcast %26 : f32 to vector<1x128xf32>
    %235 = vector.broadcast %cst_63 : f32 to vector<1x128xf32>
    %236 = arith.select %233, %234, %235 : vector<1x128xi1>, vector<1x128xf32>
    %c1_i32_64 = arith.constant 1 : i32
    %237 = vector.broadcast %c1_i32_64 : i32 to vector<1x128xi32>
    %238 = arith.cmpi eq, %231, %237 : vector<1x128xi32>
    %cst_65 = arith.constant 0.000000e+00 : f32
    %239 = vector.shape_cast %58 : vector<1x1xf32> to vector<1x1xf32>
    %240 = vector.broadcast %239 : vector<1x1xf32> to vector<1x128xf32>
    %241 = vector.broadcast %cst_65 : f32 to vector<1x128xf32>
    %242 = arith.select %238, %240, %241 : vector<1x128xi1>, vector<1x128xf32>
    %243 = arith.addf %236, %242 : vector<1x128xf32>
    %c2_i32_66 = arith.constant 2 : i32
    %244 = vector.broadcast %c2_i32_66 : i32 to vector<1x128xi32>
    %245 = arith.cmpi eq, %231, %244 : vector<1x128xi32>
    %cst_67 = arith.constant 0.000000e+00 : f32
    %246 = vector.broadcast %193 : f32 to vector<1x128xf32>
    %247 = vector.broadcast %cst_67 : f32 to vector<1x128xf32>
    %248 = arith.select %245, %246, %247 : vector<1x128xi1>, vector<1x128xf32>
    %249 = arith.addf %243, %248 : vector<1x128xf32>
    %c3_i32_68 = arith.constant 3 : i32
    %250 = vector.broadcast %c3_i32_68 : i32 to vector<1x128xi32>
    %251 = arith.cmpi eq, %231, %250 : vector<1x128xi32>
    %cst_69 = arith.constant 0.000000e+00 : f32
    %252 = vector.shape_cast %225 : vector<1x1xf32> to vector<1x1xf32>
    %253 = vector.broadcast %252 : vector<1x1xf32> to vector<1x128xf32>
    %254 = vector.broadcast %cst_69 : f32 to vector<1x128xf32>
    %255 = arith.select %251, %253, %254 : vector<1x128xi1>, vector<1x128xf32>
    %256 = arith.addf %249, %255 : vector<1x128xf32>
    %c4_i32_70 = arith.constant 4 : i32
    %257 = vector.broadcast %c4_i32_70 : i32 to vector<1x128xi32>
    %258 = arith.cmpi eq, %231, %257 : vector<1x128xi32>
    %cst_71 = arith.constant 0.000000e+00 : f32
    %259 = vector.shape_cast %230 : vector<1x1xf32> to vector<1x1xf32>
    %260 = vector.broadcast %259 : vector<1x1xf32> to vector<1x128xf32>
    %261 = vector.broadcast %cst_71 : f32 to vector<1x128xf32>
    %262 = arith.select %258, %260, %261 : vector<1x128xi1>, vector<1x128xf32>
    %263 = arith.addf %256, %262 : vector<1x128xf32>
    %c0_72 = arith.constant 0 : index
    %c0_73 = arith.constant 0 : index
    %264 = vector.load %arg8[%c0_72, %c0_73] : memref<1x128xf32, #tpu.memory_space<vmem>>, vector<1x128xf32>
    tpu.vector_store %arg8[%c0_72, %c0_73], %263 {strides = array<i32>} : memref<1x128xf32, #tpu.memory_space<vmem>>, vector<1x128xf32>,
    return
  }
}

</mosaic_0001>

<llo_original>
// kernel: trainer_forward_losses.1
$region0: #{trainer_forward_losses.1}
  #allocation0 [shape = 'u32[]', space=smem, size = 0x4, offset = 0x4, fixed_abs, tag = 'smem constant byte address 0x4 - core index']
  #allocation1 [shape = 'u32[144,128]{1,0:T(1,128)}', space=vmem, size = 0x12000, scoped, tag = 'internal scratch']
  %s0 = inlined_call_operand.vmem [shape: f32[128,4], index: 0, kind: input, shape index: {}]
  %s1 = inlined_call_operand.vmem [shape: f32[128,4], index: 1, kind: input, shape index: {}]
  %s2 = inlined_call_operand.vmem [shape: s32[128,1], index: 2, kind: input, shape index: {}]
  %s3 = inlined_call_operand.vmem [shape: f32[128,2], index: 3, kind: input, shape index: {}]
  %s4 = inlined_call_operand.vmem [shape: f32[64,32], index: 4, kind: input, shape index: {}]
  %s5 = inlined_call_operand.vmem [shape: f32[64,4], index: 5, kind: input, shape index: {}]
  %s6 = inlined_call_operand.vmem [shape: s32[64,1], index: 6, kind: input, shape index: {}]
  %s7 = inlined_call_operand.vmem [shape: f32[64,8], index: 7, kind: input, shape index: {}]
  %s8 = inlined_call_operand.vmem [shape: f32[1,128], index: 8, kind: output, shape index: {}]
  %s9 = sld [smem:[#allocation0]]
  $region42: #{trainer_forward_losses.1} parent=0
    _
  %s11 = ssub.s32 1, %s9
  %s12 = scalar_select 0, %s11, %s9
  // Predicated region
  $region2: #{trainer_forward_losses.1} parent=0 // pred_check
    _
  $region3: #{trainer_forward_losses.1} parent=0 // pred_check_branch
    %14 = sbr.rel (0) target = $region5
  $region4: #{trainer_forward_losses.1} parent=0 // pred_region
    _
  $region5: #{trainer_forward_losses.1} parent=0 // pred_fallthru
    _
  // Predicated region
  $region6: #{trainer_forward_losses.1} parent=0 // pred_check
    _
  $region7: #{trainer_forward_losses.1} parent=0 // pred_check_branch
    %16 = sbr.rel (0) target = $region9
  $region8: #{trainer_forward_losses.1} parent=0 // pred_region
    _
  $region9: #{trainer_forward_losses.1} parent=0 // pred_fallthru
    _
  // Predicated region
  $region10: #{trainer_forward_losses.1} parent=0 // pred_check
    _
  $region11: #{trainer_forward_losses.1} parent=0 // pred_check_branch
    %18 = sbr.rel (0) target = $region13
  $region12: #{trainer_forward_losses.1} parent=0 // pred_region
    _
  $region13: #{trainer_forward_losses.1} parent=0 // pred_fallthru
    _
  // Predicated region
  $region14: #{trainer_forward_losses.1} parent=0 // pred_check
    _
  $region15: #{trainer_forward_losses.1} parent=0 // pred_check_branch
    %20 = sbr.rel (0) target = $region17
  $region16: #{trainer_forward_losses.1} parent=0 // pred_region
    _
  $region17: #{trainer_forward_losses.1} parent=0 // pred_fallthru
    _
  // Predicated region
  $region18: #{trainer_forward_losses.1} parent=0 // pred_check
    _
  $region19: #{trainer_forward_losses.1} parent=0 // pred_check_branch
    %22 = sbr.rel (0) target = $region21
  $region20: #{trainer_forward_losses.1} parent=0 // pred_region
    _
  $region21: #{trainer_forward_losses.1} parent=0 // pred_fallthru
    _
  // Predicated region
  $region22: #{trainer_forward_losses.1} parent=0 // pred_check
    _
  $region23: #{trainer_forward_losses.1} parent=0 // pred_check_branch
    %24 = sbr.rel (0) target = $region25
  $region24: #{trainer_forward_losses.1} parent=0 // pred_region
    _
  $region25: #{trainer_forward_losses.1} parent=0 // pred_fallthru
    _
  // Predicated region
  $region26: #{trainer_forward_losses.1} parent=0 // pred_check
    _
  $region27: #{trainer_forward_losses.1} parent=0 // pred_check_branch
    %26 = sbr.rel (0) target = $region29
  $region28: #{trainer_forward_losses.1} parent=0 // pred_region
    _
  $region29: #{trainer_forward_losses.1} parent=0 // pred_fallthru
    _
  // Predicated region
  $region30: #{trainer_forward_losses.1} parent=0 // pred_check
    _
  $region31: #{trainer_forward_losses.1} parent=0 // pred_check_branch
    %28 = sbr.rel (0) target = $region33
  $region32: #{trainer_forward_losses.1} parent=0 // pred_region
    _
  $region33: #{trainer_forward_losses.1} parent=0 // pred_fallthru
    _
  %v29 = vld [vmem:[%s2] sm:$0xff]
  %v30 = vld [vmem:[%s2 + $0x8] sm:$0xff]
  %v31 = vld [vmem:[%s2 + $0x10] sm:$0xff]
  %v32 = vld [vmem:[%s2 + $0x18] sm:$0xff]
  %v33 = vld [vmem:[%s2 + $0x20] sm:$0xff]
  %v34 = vld [vmem:[%s2 + $0x28] sm:$0xff]
  %v35 = vld [vmem:[%s2 + $0x30] sm:$0xff]
  %v36 = vld [vmem:[%s2 + $0x38] sm:$0xff]
  %v37 = vld [vmem:[%s2 + $0x40] sm:$0xff]
  %v38 = vld [vmem:[%s2 + $0x48] sm:$0xff]
  %v39 = vld [vmem:[%s2 + $0x50] sm:$0xff]
  %v40 = vld [vmem:[%s2 + $0x58] sm:$0xff]
  %v41 = vld [vmem:[%s2 + $0x60] sm:$0xff]
  %v42 = vld [vmem:[%s2 + $0x68] sm:$0xff]
  %v43 = vld [vmem:[%s2 + $0x70] sm:$0xff]
  %v44 = vld [vmem:[%s2 + $0x78] sm:$0xff]
  %v45 = vcvt.s32.f32 %v29
  %v46 = vcvt.s32.f32 %v30
  %v47 = vcvt.s32.f32 %v31
  %v48 = vcvt.s32.f32 %v32
  %v49 = vcvt.s32.f32 %v33
  %v50 = vcvt.s32.f32 %v34
  %v51 = vcvt.s32.f32 %v35
  %v52 = vcvt.s32.f32 %v36
  %v53 = vcvt.s32.f32 %v37
  %v54 = vcvt.s32.f32 %v38
  %v55 = vcvt.s32.f32 %v39
  %v56 = vcvt.s32.f32 %v40
  %v57 = vcvt.s32.f32 %v41
  %v58 = vcvt.s32.f32 %v42
  %v59 = vcvt.s32.f32 %v43
  %v60 = vcvt.s32.f32 %v44
  %v61 = vld [vmem:[%s0] sm:$0xff]
  %v62 = vld [vmem:[%s0 + $0x8] sm:$0xff]
  %v63 = vld [vmem:[%s0 + $0x10] sm:$0xff]
  %v64 = vld [vmem:[%s0 + $0x18] sm:$0xff]
  %v65 = vld [vmem:[%s0 + $0x20] sm:$0xff]
  %v66 = vld [vmem:[%s0 + $0x28] sm:$0xff]
  %v67 = vld [vmem:[%s0 + $0x30] sm:$0xff]
  %v68 = vld [vmem:[%s0 + $0x38] sm:$0xff]
  %v69 = vld [vmem:[%s0 + $0x40] sm:$0xff]
  %v70 = vld [vmem:[%s0 + $0x48] sm:$0xff]
  %v71 = vld [vmem:[%s0 + $0x50] sm:$0xff]
  %v72 = vld [vmem:[%s0 + $0x58] sm:$0xff]
  %v73 = vld [vmem:[%s0 + $0x60] sm:$0xff]
  %v74 = vld [vmem:[%s0 + $0x68] sm:$0xff]
  %v75 = vld [vmem:[%s0 + $0x70] sm:$0xff]
  %v76 = vld [vmem:[%s0 + $0x78] sm:$0xff]
  %v77 = vld [vmem:[%s1] sm:$0xff]
  %v78 = vld [vmem:[%s1 + $0x8] sm:$0xff]
  %v79 = vld [vmem:[%s1 + $0x10] sm:$0xff]
  %v80 = vld [vmem:[%s1 + $0x18] sm:$0xff]
  %v81 = vld [vmem:[%s1 + $0x20] sm:$0xff]
  %v82 = vld [vmem:[%s1 + $0x28] sm:$0xff]
  %v83 = vld [vmem:[%s1 + $0x30] sm:$0xff]
  %v84 = vld [vmem:[%s1 + $0x38] sm:$0xff]
  %v85 = vld [vmem:[%s1 + $0x40] sm:$0xff]
  %v86 = vld [vmem:[%s1 + $0x48] sm:$0xff]
  %v87 = vld [vmem:[%s1 + $0x50] sm:$0xff]
  %v88 = vld [vmem:[%s1 + $0x58] sm:$0xff]
  %v89 = vld [vmem:[%s1 + $0x60] sm:$0xff]
  %v90 = vld [vmem:[%s1 + $0x68] sm:$0xff]
  %v91 = vld [vmem:[%s1 + $0x70] sm:$0xff]
  %v92 = vld [vmem:[%s1 + $0x78] sm:$0xff]
  %v93 = vsub.f32 %v61, %v77
  %v94 = vsub.f32 %v62, %v78
  %v95 = vsub.f32 %v63, %v79
  %v96 = vsub.f32 %v64, %v80
  %v97 = vsub.f32 %v65, %v81
  %v98 = vsub.f32 %v66, %v82
  %v99 = vsub.f32 %v67, %v83
  %v100 = vsub.f32 %v68, %v84
  %v101 = vsub.f32 %v69, %v85
  %v102 = vsub.f32 %v70, %v86
  %v103 = vsub.f32 %v71, %v87
  %v104 = vsub.f32 %v72, %v88
  %v105 = vsub.f32 %v73, %v89
  %v106 = vsub.f32 %v74, %v90
  %v107 = vsub.f32 %v75, %v91
  %v108 = vsub.f32 %v76, %v92
  %110 = vset.pattern.permute.xlu0 0
  %111 = vperm.xlu0 %110, %v45
  %v112 = vpop.permute.xlu0 %111
  %115 = vset.pattern.permute.xlu0 0
  %116 = vperm.xlu0 %115, %v46
  %v117 = vpop.permute.xlu0 %116
  %120 = vset.pattern.permute.xlu0 0
  %121 = vperm.xlu0 %120, %v47
  %v122 = vpop.permute.xlu0 %121
  %125 = vset.pattern.permute.xlu0 0
  %126 = vperm.xlu0 %125, %v48
  %v127 = vpop.permute.xlu0 %126
  %130 = vset.pattern.permute.xlu0 0
  %131 = vperm.xlu0 %130, %v49
  %v132 = vpop.permute.xlu0 %131
  %135 = vset.pattern.permute.xlu0 0
  %136 = vperm.xlu0 %135, %v50
  %v137 = vpop.permute.xlu0 %136
  %140 = vset.pattern.permute.xlu0 0
  %141 = vperm.xlu0 %140, %v51
  %v142 = vpop.permute.xlu0 %141
  %145 = vset.pattern.permute.xlu0 0
  %146 = vperm.xlu0 %145, %v52
  %v147 = vpop.permute.xlu0 %146
  %150 = vset.pattern.permute.xlu0 0
  %151 = vperm.xlu0 %150, %v53
  %v152 = vpop.permute.xlu0 %151
  %155 = vset.pattern.permute.xlu0 0
  %156 = vperm.xlu0 %155, %v54
  %v157 = vpop.permute.xlu0 %156
  %160 = vset.pattern.permute.xlu0 0
  %161 = vperm.xlu0 %160, %v55
  %v162 = vpop.permute.xlu0 %161
  %165 = vset.pattern.permute.xlu0 0
  %166 = vperm.xlu0 %165, %v56
  %v167 = vpop.permute.xlu0 %166
  %170 = vset.pattern.permute.xlu0 0
  %171 = vperm.xlu0 %170, %v57
  %v172 = vpop.permute.xlu0 %171
  %175 = vset.pattern.permute.xlu0 0
  %176 = vperm.xlu0 %175, %v58
  %v177 = vpop.permute.xlu0 %176
  %180 = vset.pattern.permute.xlu0 0
  %181 = vperm.xlu0 %180, %v59
  %v182 = vpop.permute.xlu0 %181
  %185 = vset.pattern.permute.xlu0 0
  %186 = vperm.xlu0 %185, %v60
  %v187 = vpop.permute.xlu0 %186
  %v189 = vmul.f32 %v93, %v112
  %v190 = vmul.f32 %v94, %v117
  %v191 = vmul.f32 %v95, %v122
  %v192 = vmul.f32 %v96, %v127
  %v193 = vmul.f32 %v97, %v132
  %v194 = vmul.f32 %v98, %v137
  %v195 = vmul.f32 %v99, %v142
  %v196 = vmul.f32 %v100, %v147
  %v197 = vmul.f32 %v101, %v152
  %v198 = vmul.f32 %v102, %v157
  %v199 = vmul.f32 %v103, %v162
  %v200 = vmul.f32 %v104, %v167
  %v201 = vmul.f32 %v105, %v172
  %v202 = vmul.f32 %v106, %v177
  %v203 = vmul.f32 %v107, %v182
  %v204 = vmul.f32 %v108, %v187
  %v205 = vand.u32 2147483647, %v189
  %v206 = vand.u32 2147483647, %v190
  %v207 = vand.u32 2147483647, %v191
  %v208 = vand.u32 2147483647, %v192
  %v209 = vand.u32 2147483647, %v193
  %v210 = vand.u32 2147483647, %v194
  %v211 = vand.u32 2147483647, %v195
  %v212 = vand.u32 2147483647, %v196
  %v213 = vand.u32 2147483647, %v197
  %v214 = vand.u32 2147483647, %v198
  %v215 = vand.u32 2147483647, %v199
  %v216 = vand.u32 2147483647, %v200
  %v217 = vand.u32 2147483647, %v201
  %v218 = vand.u32 2147483647, %v202
  %v219 = vand.u32 2147483647, %v203
  %v220 = vand.u32 2147483647, %v204
  %vm221 = vcmp.lt.f32.partialorder %v205, 0.11111111
  %vm222 = vcmp.lt.f32.partialorder %v206, 0.11111111
  %vm223 = vcmp.lt.f32.partialorder %v207, 0.11111111
  %vm224 = vcmp.lt.f32.partialorder %v208, 0.11111111
  %vm225 = vcmp.lt.f32.partialorder %v209, 0.11111111
  %vm226 = vcmp.lt.f32.partialorder %v210, 0.11111111
  %vm227 = vcmp.lt.f32.partialorder %v211, 0.11111111
  %vm228 = vcmp.lt.f32.partialorder %v212, 0.11111111
  %vm229 = vcmp.lt.f32.partialorder %v213, 0.11111111
  %vm230 = vcmp.lt.f32.partialorder %v214, 0.11111111
  %vm231 = vcmp.lt.f32.partialorder %v215, 0.11111111
  %vm232 = vcmp.lt.f32.partialorder %v216, 0.11111111
  %vm233 = vcmp.lt.f32.partialorder %v217, 0.11111111
  %vm234 = vcmp.lt.f32.partialorder %v218, 0.11111111
  %vm235 = vcmp.lt.f32.partialorder %v219, 0.11111111
  %vm236 = vcmp.lt.f32.partialorder %v220, 0.11111111
  %v237 = vsel %vm221, 1, 0
  %v238 = vsel %vm222, 1, 0
  %v239 = vsel %vm223, 1, 0
  %v240 = vsel %vm224, 1, 0
  %v241 = vsel %vm225, 1, 0
  %v242 = vsel %vm226, 1, 0
  %v243 = vsel %vm227, 1, 0
  %v244 = vsel %vm228, 1, 0
  %v245 = vsel %vm229, 1, 0
  %v246 = vsel %vm230, 1, 0
  %v247 = vsel %vm231, 1, 0
  %v248 = vsel %vm232, 1, 0
  %v249 = vsel %vm233, 1, 0
  %v250 = vsel %vm234, 1, 0
  %v251 = vsel %vm235, 1, 0
  %v252 = vsel %vm236, 1, 0
  %v253 = vcvt.s32.f32 %v237
  %v254 = vcvt.s32.f32 %v238
  %v255 = vcvt.s32.f32 %v239
  %v256 = vcvt.s32.f32 %v240
  %v257 = vcvt.s32.f32 %v241
  %v258 = vcvt.s32.f32 %v242
  %v259 = vcvt.s32.f32 %v243
  %v260 = vcvt.s32.f32 %v244
  %v261 = vcvt.s32.f32 %v245
  %v262 = vcvt.s32.f32 %v246
  %v263 = vcvt.s32.f32 %v247
  %v264 = vcvt.s32.f32 %v248
  %v265 = vcvt.s32.f32 %v249
  %v266 = vcvt.s32.f32 %v250
  %v267 = vcvt.s32.f32 %v251
  %v268 = vcvt.s32.f32 %v252
  %v269 = vmul.f32 %v205, 4.5
  %v270 = vmul.f32 %v206, 4.5
  %v271 = vmul.f32 %v207, 4.5
  %v272 = vmul.f32 %v208, 4.5
  %v273 = vmul.f32 %v209, 4.5
  %v274 = vmul.f32 %v210, 4.5
  %v275 = vmul.f32 %v211, 4.5
  %v276 = vmul.f32 %v212, 4.5
  %v277 = vmul.f32 %v213, 4.5
  %v278 = vmul.f32 %v214, 4.5
  %v279 = vmul.f32 %v215, 4.5
  %v280 = vmul.f32 %v216, 4.5
  %v281 = vmul.f32 %v217, 4.5
  %v282 = vmul.f32 %v218, 4.5
  %v283 = vmul.f32 %v219, 4.5
  %v284 = vmul.f32 %v220, 4.5
  %v285 = vmul.f32 %v269, %v205
  %v286 = vmul.f32 %v270, %v206
  %v287 = vmul.f32 %v271, %v207
  %v288 = vmul.f32 %v272, %v208
  %v289 = vmul.f32 %v273, %v209
  %v290 = vmul.f32 %v274, %v210
  %v291 = vmul.f32 %v275, %v211
  %v292 = vmul.f32 %v276, %v212
  %v293 = vmul.f32 %v277, %v213
  %v294 = vmul.f32 %v278, %v214
  %v295 = vmul.f32 %v279, %v215
  %v296 = vmul.f32 %v280, %v216
  %v297 = vmul.f32 %v281, %v217
  %v298 = vmul.f32 %v282, %v218
  %v299 = vmul.f32 %v283, %v219
  %v300 = vmul.f32 %v284, %v220
  %v301 = vmul.f32 %v253, %v285
  %v302 = vmul.f32 %v254, %v286
  %v303 = vmul.f32 %v255, %v287
  %v304 = vmul.f32 %v256, %v288
  %v305 = vmul.f32 %v257, %v289
  %v306 = vmul.f32 %v258, %v290
  %v307 = vmul.f32 %v259, %v291
  %v308 = vmul.f32 %v260, %v292
  %v309 = vmul.f32 %v261, %v293
  %v310 = vmul.f32 %v262, %v294
  %v311 = vmul.f32 %v263, %v295
  %v312 = vmul.f32 %v264, %v296
  %v313 = vmul.f32 %v265, %v297
  %v314 = vmul.f32 %v266, %v298
  %v315 = vmul.f32 %v267, %v299
  %v316 = vmul.f32 %v268, %v300
  %v317 = vsub.f32 1.0, %v253
  %v318 = vsub.f32 1.0, %v254
  %v319 = vsub.f32 1.0, %v255
  %v320 = vsub.f32 1.0, %v256
  %v321 = vsub.f32 1.0, %v257
  %v322 = vsub.f32 1.0, %v258
  %v323 = vsub.f32 1.0, %v259
  %v324 = vsub.f32 1.0, %v260
  %v325 = vsub.f32 1.0, %v261
  %v326 = vsub.f32 1.0, %v262
  %v327 = vsub.f32 1.0, %v263
  %v328 = vsub.f32 1.0, %v264
  %v329 = vsub.f32 1.0, %v265
  %v330 = vsub.f32 1.0, %v266
  %v331 = vsub.f32 1.0, %v267
  %v332 = vsub.f32 1.0, %v268
  %v333 = vsub.f32 %v205, 0.055555556
  %v334 = vsub.f32 %v206, 0.055555556
  %v335 = vsub.f32 %v207, 0.055555556
  %v336 = vsub.f32 %v208, 0.055555556
  %v337 = vsub.f32 %v209, 0.055555556
  %v338 = vsub.f32 %v210, 0.055555556
  %v339 = vsub.f32 %v211, 0.055555556
  %v340 = vsub.f32 %v212, 0.055555556
  %v341 = vsub.f32 %v213, 0.055555556
  %v342 = vsub.f32 %v214, 0.055555556
  %v343 = vsub.f32 %v215, 0.055555556
  %v344 = vsub.f32 %v216, 0.055555556
  %v345 = vsub.f32 %v217, 0.055555556
  %v346 = vsub.f32 %v218, 0.055555556
  %v347 = vsub.f32 %v219, 0.055555556
  %v348 = vsub.f32 %v220, 0.055555556
  %v349 = vmul.f32 %v317, %v333
  %v350 = vmul.f32 %v318, %v334
  %v351 = vmul.f32 %v319, %v335
  %v352 = vmul.f32 %v320, %v336
  %v353 = vmul.f32 %v321, %v337
  %v354 = vmul.f32 %v322, %v338
  %v355 = vmul.f32 %v323, %v339
  %v356 = vmul.f32 %v324, %v340
  %v357 = vmul.f32 %v325, %v341
  %v358 = vmul.f32 %v326, %v342
  %v359 = vmul.f32 %v327, %v343
  %v360 = vmul.f32 %v328, %v344
  %v361 = vmul.f32 %v329, %v345
  %v362 = vmul.f32 %v330, %v346
  %v363 = vmul.f32 %v331, %v347
  %v364 = vmul.f32 %v332, %v348
  %v365 = vadd.f32 %v301, %v349
  %v366 = vadd.f32 %v302, %v350
  %v367 = vadd.f32 %v303, %v351
  %v368 = vadd.f32 %v304, %v352
  %v369 = vadd.f32 %v305, %v353
  %v370 = vadd.f32 %v306, %v354
  %v371 = vadd.f32 %v307, %v355
  %v372 = vadd.f32 %v308, %v356
  %v373 = vadd.f32 %v309, %v357
  %v374 = vadd.f32 %v310, %v358
  %v375 = vadd.f32 %v311, %v359
  %v376 = vadd.f32 %v312, %v360
  %v377 = vadd.f32 %v313, %v361
  %v378 = vadd.f32 %v314, %v362
  %v379 = vadd.f32 %v315, %v363
  %v380 = vadd.f32 %v316, %v364
  %vm381 = vcmask 31744
  %v382 = vsel %vm381, %v365, 0.0
  %v383 = vsel %vm381, %v366, 0.0
  %v384 = vadd.f32 %v382, %v383
  %v385 = vsel %vm381, %v367, 0.0
  %v386 = vadd.f32 %v384, %v385
  %v387 = vsel %vm381, %v368, 0.0
  %v388 = vadd.f32 %v386, %v387
  %v389 = vsel %vm381, %v369, 0.0
  %v390 = vadd.f32 %v388, %v389
  %v391 = vsel %vm381, %v370, 0.0
  %v392 = vadd.f32 %v390, %v391
  %v393 = vsel %vm381, %v371, 0.0
  %v394 = vadd.f32 %v392, %v393
  %v395 = vsel %vm381, %v372, 0.0
  %v396 = vadd.f32 %v394, %v395
  %v397 = vsel %vm381, %v373, 0.0
  %v398 = vadd.f32 %v396, %v397
  %v399 = vsel %vm381, %v374, 0.0
  %v400 = vadd.f32 %v398, %v399
  %v401 = vsel %vm381, %v375, 0.0
  %v402 = vadd.f32 %v400, %v401
  %v403 = vsel %vm381, %v376, 0.0
  %v404 = vadd.f32 %v402, %v403
  %v405 = vsel %vm381, %v377, 0.0
  %v406 = vadd.f32 %v404, %v405
  %v407 = vsel %vm381, %v378, 0.0
  %v408 = vadd.f32 %v406, %v407
  %v409 = vsel %vm381, %v379, 0.0
  %v410 = vadd.f32 %v408, %v409
  %v411 = vsel %vm381, %v380, 0.0
  %v412 = vadd.f32 %v410, %v411
  %413 = vadd.xlane.f32.xlu0 %v412
  %v414 = vpop.xlane.xlu0 %413
  %v415 = vrot.slane %v414, 4
  %v416 = vadd.f32 %v414, %v415
  %v417 = vrot.slane %v416, 2
  %v418 = vadd.f32 %v416, %v417
  %v419 = vrot.slane %v418, 1
  %v420 = vadd.f32 %v418, %v419
  %s421 = vtos %v420
  %s422 = smul.f32 %s421, 0.0078125
  %v423 = vld [vmem:[%s3] sm:$0xff]
  %v424 = vld [vmem:[%s3 + $0x8] sm:$0xff]
  %v425 = vld [vmem:[%s3 + $0x10] sm:$0xff]
  %v426 = vld [vmem:[%s3 + $0x18] sm:$0xff]
  %v427 = vld [vmem:[%s3 + $0x20] sm:$0xff]
  %v428 = vld [vmem:[%s3 + $0x28] sm:$0xff]
  %v429 = vld [vmem:[%s3 + $0x30] sm:$0xff]
  %v430 = vld [vmem:[%s3 + $0x38] sm:$0xff]
  %v431 = vld [vmem:[%s3 + $0x40] sm:$0xff]
  %v432 = vld [vmem:[%s3 + $0x48] sm:$0xff]
  %v433 = vld [vmem:[%s3 + $0x50] sm:$0xff]
  %v434 = vld [vmem:[%s3 + $0x58] sm:$0xff]
  %v435 = vld [vmem:[%s3 + $0x60] sm:$0xff]
  %v436 = vld [vmem:[%s3 + $0x68] sm:$0xff]
  %v437 = vld [vmem:[%s3 + $0x70] sm:$0xff]
  %v438 = vld [vmem:[%s3 + $0x78] sm:$0xff]
  %vm439 = vcmask 15360
  %v440 = vsel %vm439, %v423, -inf
  %441 = vmax.xlane.f32.xlu0 %v440
  %v442 = vpop.xlane.xlu0 %441
  %v443 = vsel %vm439, %v424, -inf
  %444 = vmax.xlane.f32.xlu0 %v443
  %v445 = vpop.xlane.xlu0 %444
  %v446 = vsel %vm439, %v425, -inf
  %447 = vmax.xlane.f32.xlu0 %v446
  %v448 = vpop.xlane.xlu0 %447
  %v449 = vsel %vm439, %v426, -inf
  %450 = vmax.xlane.f32.xlu0 %v449
  %v451 = vpop.xlane.xlu0 %450
  %v452 = vsel %vm439, %v427, -inf
  %453 = vmax.xlane.f32.xlu0 %v452
  %v454 = vpop.xlane.xlu0 %453
  %v455 = vsel %vm439, %v428, -inf
  %456 = vmax.xlane.f32.xlu0 %v455
  %v457 = vpop.xlane.xlu0 %456
  %v458 = vsel %vm439, %v429, -inf
  %459 = vmax.xlane.f32.xlu0 %v458
  %v460 = vpop.xlane.xlu0 %459
  %v461 = vsel %vm439, %v430, -inf
  %462 = vmax.xlane.f32.xlu0 %v461
  %v463 = vpop.xlane.xlu0 %462
  %v464 = vsel %vm439, %v431, -inf
  %465 = vmax.xlane.f32.xlu0 %v464
  %v466 = vpop.xlane.xlu0 %465
  %v467 = vsel %vm439, %v432, -inf
  %468 = vmax.xlane.f32.xlu0 %v467
  %v469 = vpop.xlane.xlu0 %468
  %v470 = vsel %vm439, %v433, -inf
  %471 = vmax.xlane.f32.xlu0 %v470
  %v472 = vpop.xlane.xlu0 %471
  %v473 = vsel %vm439, %v434, -inf
  %474 = vmax.xlane.f32.xlu0 %v473
  %v475 = vpop.xlane.xlu0 %474
  %v476 = vsel %vm439, %v435, -inf
  %477 = vmax.xlane.f32.xlu0 %v476
  %v478 = vpop.xlane.xlu0 %477
  %v479 = vsel %vm439, %v436, -inf
  %480 = vmax.xlane.f32.xlu0 %v479
  %v481 = vpop.xlane.xlu0 %480
  %v482 = vsel %vm439, %v437, -inf
  %483 = vmax.xlane.f32.xlu0 %v482
  %v484 = vpop.xlane.xlu0 %483
  %v485 = vsel %vm439, %v438, -inf
  %486 = vmax.xlane.f32.xlu0 %v485
  %v487 = vpop.xlane.xlu0 %486
  %v488 = vsub.f32 %v423, %v442
  %v489 = vsub.f32 %v424, %v445
  %v490 = vsub.f32 %v425, %v448
  %v491 = vsub.f32 %v426, %v451
  %v492 = vsub.f32 %v427, %v454
  %v493 = vsub.f32 %v428, %v457
  %v494 = vsub.f32 %v429, %v460
  %v495 = vsub.f32 %v430, %v463
  %v496 = vsub.f32 %v431, %v466
  %v497 = vsub.f32 %v432, %v469
  %v498 = vsub.f32 %v433, %v472
  %v499 = vsub.f32 %v434, %v475
  %v500 = vsub.f32 %v435, %v478
  %v501 = vsub.f32 %v436, %v481
  %v502 = vsub.f32 %v437, %v484
  %v503 = vsub.f32 %v438, %v487
  %v504 = vmul.f32 %v488, 1.442695
  %v505 = vpow.pop %v504
  %v506 = vmul.f32 %v489, 1.442695
  %v507 = vpow.pop %v506
  %v508 = vmul.f32 %v490, 1.442695
  %v509 = vpow.pop %v508
  %v510 = vmul.f32 %v491, 1.442695
  %v511 = vpow.pop %v510
  %v512 = vmul.f32 %v492, 1.442695
  %v513 = vpow.pop %v512
  %v514 = vmul.f32 %v493, 1.442695
  %v515 = vpow.pop %v514
  %v516 = vmul.f32 %v494, 1.442695
  %v517 = vpow.pop %v516
  %v518 = vmul.f32 %v495, 1.442695
  %v519 = vpow.pop %v518
  %v520 = vmul.f32 %v496, 1.442695
  %v521 = vpow.pop %v520
  %v522 = vmul.f32 %v497, 1.442695
  %v523 = vpow.pop %v522
  %v524 = vmul.f32 %v498, 1.442695
  %v525 = vpow.pop %v524
  %v526 = vmul.f32 %v499, 1.442695
  %v527 = vpow.pop %v526
  %v528 = vmul.f32 %v500, 1.442695
  %v529 = vpow.pop %v528
  %v530 = vmul.f32 %v501, 1.442695
  %v531 = vpow.pop %v530
  %v532 = vmul.f32 %v502, 1.442695
  %v533 = vpow.pop %v532
  %v534 = vmul.f32 %v503, 1.442695
  %v535 = vpow.pop %v534
  %v536 = vsel %vm439, %v505, 0.0
  %537 = vadd.xlane.f32.xlu0 %v536
  %v538 = vpop.xlane.xlu0 %537
  %v539 = vsel %vm439, %v507, 0.0
  %540 = vadd.xlane.f32.xlu0 %v539
  %v541 = vpop.xlane.xlu0 %540
  %v542 = vsel %vm439, %v509, 0.0
  %543 = vadd.xlane.f32.xlu0 %v542
  %v544 = vpop.xlane.xlu0 %543
  %v545 = vsel %vm439, %v511, 0.0
  %546 = vadd.xlane.f32.xlu0 %v545
  %v547 = vpop.xlane.xlu0 %546
  %v548 = vsel %vm439, %v513, 0.0
  %549 = vadd.xlane.f32.xlu0 %v548
  %v550 = vpop.xlane.xlu0 %549
  %v551 = vsel %vm439, %v515, 0.0
  %552 = vadd.xlane.f32.xlu0 %v551
  %v553 = vpop.xlane.xlu0 %552
  %v554 = vsel %vm439, %v517, 0.0
  %555 = vadd.xlane.f32.xlu0 %v554
  %v556 = vpop.xlane.xlu0 %555
  %v557 = vsel %vm439, %v519, 0.0
  %558 = vadd.xlane.f32.xlu0 %v557
  %v559 = vpop.xlane.xlu0 %558
  %v560 = vsel %vm439, %v521, 0.0
  %561 = vadd.xlane.f32.xlu0 %v560
  %v562 = vpop.xlane.xlu0 %561
  %v563 = vsel %vm439, %v523, 0.0
  %564 = vadd.xlane.f32.xlu0 %v563
  %v565 = vpop.xlane.xlu0 %564
  %v566 = vsel %vm439, %v525, 0.0
  %567 = vadd.xlane.f32.xlu0 %v566
  %v568 = vpop.xlane.xlu0 %567
  %v569 = vsel %vm439, %v527, 0.0
  %570 = vadd.xlane.f32.xlu0 %v569
  %v571 = vpop.xlane.xlu0 %570
  %v572 = vsel %vm439, %v529, 0.0
  %573 = vadd.xlane.f32.xlu0 %v572
  %v574 = vpop.xlane.xlu0 %573
  %v575 = vsel %vm439, %v531, 0.0
  %576 = vadd.xlane.f32.xlu0 %v575
  %v577 = vpop.xlane.xlu0 %576
  %v578 = vsel %vm439, %v533, 0.0
  %579 = vadd.xlane.f32.xlu0 %v578
  %v580 = vpop.xlane.xlu0 %579
  %v581 = vsel %vm439, %v535, 0.0
  %582 = vadd.xlane.f32.xlu0 %v581
  %v583 = vpop.xlane.xlu0 %582
  %v584 = vlog2.pop %v538
  %v585 = vmul.f32 %v584, 0.6931472
  %v586 = vlog2.pop %v541
  %v587 = vmul.f32 %v586, 0.6931472
  %v588 = vlog2.pop %v544
  %v589 = vmul.f32 %v588, 0.6931472
  %v590 = vlog2.pop %v547
  %v591 = vmul.f32 %v590, 0.6931472
  %v592 = vlog2.pop %v550
  %v593 = vmul.f32 %v592, 0.6931472
  %v594 = vlog2.pop %v553
  %v595 = vmul.f32 %v594, 0.6931472
  %v596 = vlog2.pop %v556
  %v597 = vmul.f32 %v596, 0.6931472
  %v598 = vlog2.pop %v559
  %v599 = vmul.f32 %v598, 0.6931472
  %v600 = vlog2.pop %v562
  %v601 = vmul.f32 %v600, 0.6931472
  %v602 = vlog2.pop %v565
  %v603 = vmul.f32 %v602, 0.6931472
  %v604 = vlog2.pop %v568
  %v605 = vmul.f32 %v604, 0.6931472
  %v606 = vlog2.pop %v571
  %v607 = vmul.f32 %v606, 0.6931472
  %v608 = vlog2.pop %v574
  %v609 = vmul.f32 %v608, 0.6931472
  %v610 = vlog2.pop %v577
  %v611 = vmul.f32 %v610, 0.6931472
  %v612 = vlog2.pop %v580
  %v613 = vmul.f32 %v612, 0.6931472
  %v614 = vlog2.pop %v583
  %v615 = vmul.f32 %v614, 0.6931472
  %v616 = vadd.f32 %v442, %v585
  %v617 = vadd.f32 %v445, %v587
  %v618 = vadd.f32 %v448, %v589
  %v619 = vadd.f32 %v451, %v591
  %v620 = vadd.f32 %v454, %v593
  %v621 = vadd.f32 %v457, %v595
  %v622 = vadd.f32 %v460, %v597
  %v623 = vadd.f32 %v463, %v599
  %v624 = vadd.f32 %v466, %v601
  %v625 = vadd.f32 %v469, %v603
  %v626 = vadd.f32 %v472, %v605
  %v627 = vadd.f32 %v475, %v607
  %v628 = vadd.f32 %v478, %v609
  %v629 = vadd.f32 %v481, %v611
  %v630 = vadd.f32 %v484, %v613
  %v631 = vadd.f32 %v487, %v615
  %v632 = vlaneseq
  %v633 = vand.u32 %v632, 127
  %634 = vset.pattern.permute.xlu0 0
  %635 = vperm.xlu0 %634, %v29
  %v636 = vpop.permute.xlu0 %635
  %637 = vset.pattern.permute.xlu0 0
  %638 = vperm.xlu0 %637, %v30
  %v639 = vpop.permute.xlu0 %638
  %640 = vset.pattern.permute.xlu0 0
  %641 = vperm.xlu0 %640, %v31
  %v642 = vpop.permute.xlu0 %641
  %643 = vset.pattern.permute.xlu0 0
  %644 = vperm.xlu0 %643, %v32
  %v645 = vpop.permute.xlu0 %644
  %646 = vset.pattern.permute.xlu0 0
  %647 = vperm.xlu0 %646, %v33
  %v648 = vpop.permute.xlu0 %647
  %649 = vset.pattern.permute.xlu0 0
  %650 = vperm.xlu0 %649, %v34
  %v651 = vpop.permute.xlu0 %650
  %652 = vset.pattern.permute.xlu0 0
  %653 = vperm.xlu0 %652, %v35
  %v654 = vpop.permute.xlu0 %653
  %655 = vset.pattern.permute.xlu0 0
  %656 = vperm.xlu0 %655, %v36
  %v657 = vpop.permute.xlu0 %656
  %658 = vset.pattern.permute.xlu0 0
  %659 = vperm.xlu0 %658, %v37
  %v660 = vpop.permute.xlu0 %659
  %661 = vset.pattern.permute.xlu0 0
  %662 = vperm.xlu0 %661, %v38
  %v663 = vpop.permute.xlu0 %662
  %664 = vset.pattern.permute.xlu0 0
  %665 = vperm.xlu0 %664, %v39
  %v666 = vpop.permute.xlu0 %665
  %667 = vset.pattern.permute.xlu0 0
  %668 = vperm.xlu0 %667, %v40
  %v669 = vpop.permute.xlu0 %668
  %670 = vset.pattern.permute.xlu0 0
  %671 = vperm.xlu0 %670, %v41
  %v672 = vpop.permute.xlu0 %671
  %673 = vset.pattern.permute.xlu0 0
  %674 = vperm.xlu0 %673, %v42
  %v675 = vpop.permute.xlu0 %674
  %676 = vset.pattern.permute.xlu0 0
  %677 = vperm.xlu0 %676, %v43
  %v678 = vpop.permute.xlu0 %677
  %679 = vset.pattern.permute.xlu0 0
  %680 = vperm.xlu0 %679, %v44
  %v681 = vpop.permute.xlu0 %680
  %vm682 = vcmp.eq.s32.totalorder %v633, %v636
  %vm683 = vcmp.eq.s32.totalorder %v633, %v639
  %vm684 = vcmp.eq.s32.totalorder %v633, %v642
  %vm685 = vcmp.eq.s32.totalorder %v633, %v645
  %vm686 = vcmp.eq.s32.totalorder %v633, %v648
  %vm687 = vcmp.eq.s32.totalorder %v633, %v651
  %vm688 = vcmp.eq.s32.totalorder %v633, %v654
  %vm689 = vcmp.eq.s32.totalorder %v633, %v657
  %vm690 = vcmp.eq.s32.totalorder %v633, %v660
  %vm691 = vcmp.eq.s32.totalorder %v633, %v663
  %vm692 = vcmp.eq.s32.totalorder %v633, %v666
  %vm693 = vcmp.eq.s32.totalorder %v633, %v669
  %vm694 = vcmp.eq.s32.totalorder %v633, %v672
  %vm695 = vcmp.eq.s32.totalorder %v633, %v675
  %vm696 = vcmp.eq.s32.totalorder %v633, %v678
  %vm697 = vcmp.eq.s32.totalorder %v633, %v681
  %v698 = vsel %vm682, 1, 0
  %v699 = vsel %vm683, 1, 0
  %v700 = vsel %vm684, 1, 0
  %v701 = vsel %vm685, 1, 0
  %v702 = vsel %vm686, 1, 0
  %v703 = vsel %vm687, 1, 0
  %v704 = vsel %vm688, 1, 0
  %v705 = vsel %vm689, 1, 0
  %v706 = vsel %vm690, 1, 0
  %v707 = vsel %vm691, 1, 0
  %v708 = vsel %vm692, 1, 0
  %v709 = vsel %vm693, 1, 0
  %v710 = vsel %vm694, 1, 0
  %v711 = vsel %vm695, 1, 0
  %v712 = vsel %vm696, 1, 0
  %v713 = vsel %vm697, 1, 0
  %v714 = vcvt.s32.f32 %v698
  %v715 = vcvt.s32.f32 %v699
  %v716 = vcvt.s32.f32 %v700
  %v717 = vcvt.s32.f32 %v701
  %v718 = vcvt.s32.f32 %v702
  %v719 = vcvt.s32.f32 %v703
  %v720 = vcvt.s32.f32 %v704
  %v721 = vcvt.s32.f32 %v705
  %v722 = vcvt.s32.f32 %v706
  %v723 = vcvt.s32.f32 %v707
  %v724 = vcvt.s32.f32 %v708
  %v725 = vcvt.s32.f32 %v709
  %v726 = vcvt.s32.f32 %v710
  %v727 = vcvt.s32.f32 %v711
  %v728 = vcvt.s32.f32 %v712
  %v729 = vcvt.s32.f32 %v713
  %v730 = vmul.f32 %v714, %v423
  %v731 = vmul.f32 %v715, %v424
  %v732 = vmul.f32 %v716, %v425
  %v733 = vmul.f32 %v717, %v426
  %v734 = vmul.f32 %v718, %v427
  %v735 = vmul.f32 %v719, %v428
  %v736 = vmul.f32 %v720, %v429
  %v737 = vmul.f32 %v721, %v430
  %v738 = vmul.f32 %v722, %v431
  %v739 = vmul.f32 %v723, %v432
  %v740 = vmul.f32 %v724, %v433
  %v741 = vmul.f32 %v725, %v434
  %v742 = vmul.f32 %v726, %v435
  %v743 = vmul.f32 %v727, %v436
  %v744 = vmul.f32 %v728, %v437
  %v745 = vmul.f32 %v729, %v438
  %v746 = vsel %vm439, %v730, 0.0
  %747 = vadd.xlane.f32.xlu0 %v746
  %v748 = vpop.xlane.xlu0 %747
  %v749 = vsel %vm439, %v731, 0.0
  %750 = vadd.xlane.f32.xlu0 %v749
  %v751 = vpop.xlane.xlu0 %750
  %v752 = vsel %vm439, %v732, 0.0
  %753 = vadd.xlane.f32.xlu0 %v752
  %v754 = vpop.xlane.xlu0 %753
  %v755 = vsel %vm439, %v733, 0.0
  %756 = vadd.xlane.f32.xlu0 %v755
  %v757 = vpop.xlane.xlu0 %756
  %v758 = vsel %vm439, %v734, 0.0
  %759 = vadd.xlane.f32.xlu0 %v758
  %v760 = vpop.xlane.xlu0 %759
  %v761 = vsel %vm439, %v735, 0.0
  %762 = vadd.xlane.f32.xlu0 %v761
  %v763 = vpop.xlane.xlu0 %762
  %v764 = vsel %vm439, %v736, 0.0
  %765 = vadd.xlane.f32.xlu0 %v764
  %v766 = vpop.xlane.xlu0 %765
  %v767 = vsel %vm439, %v737, 0.0
  %768 = vadd.xlane.f32.xlu0 %v767
  %v769 = vpop.xlane.xlu0 %768
  %v770 = vsel %vm439, %v738, 0.0
  %771 = vadd.xlane.f32.xlu0 %v770
  %v772 = vpop.xlane.xlu0 %771
  %v773 = vsel %vm439, %v739, 0.0
  %774 = vadd.xlane.f32.xlu0 %v773
  %v775 = vpop.xlane.xlu0 %774
  %v776 = vsel %vm439, %v740, 0.0
  %777 = vadd.xlane.f32.xlu0 %v776
  %v778 = vpop.xlane.xlu0 %777
  %v779 = vsel %vm439, %v741, 0.0
  %780 = vadd.xlane.f32.xlu0 %v779
  %v781 = vpop.xlane.xlu0 %780
  %v782 = vsel %vm439, %v742, 0.0
  %783 = vadd.xlane.f32.xlu0 %v782
  %v784 = vpop.xlane.xlu0 %783
  %v785 = vsel %vm439, %v743, 0.0
  %786 = vadd.xlane.f32.xlu0 %v785
  %v787 = vpop.xlane.xlu0 %786
  %v788 = vsel %vm439, %v744, 0.0
  %789 = vadd.xlane.f32.xlu0 %v788
  %v790 = vpop.xlane.xlu0 %789
  %v791 = vsel %vm439, %v745, 0.0
  %792 = vadd.xlane.f32.xlu0 %v791
  %v793 = vpop.xlane.xlu0 %792
  %vm794 = vcmp.ne.s32.totalorder %v29, 4294967295
  %vm795 = vcmp.ne.s32.totalorder %v30, 4294967295
  %vm796 = vcmp.ne.s32.totalorder %v31, 4294967295
  %vm797 = vcmp.ne.s32.totalorder %v32, 4294967295
  %vm798 = vcmp.ne.s32.totalorder %v33, 4294967295
  %vm799 = vcmp.ne.s32.totalorder %v34, 4294967295
  %vm800 = vcmp.ne.s32.totalorder %v35, 4294967295
  %vm801 = vcmp.ne.s32.totalorder %v36, 4294967295
  %vm802 = vcmp.ne.s32.totalorder %v37, 4294967295
  %vm803 = vcmp.ne.s32.totalorder %v38, 4294967295
  %vm804 = vcmp.ne.s32.totalorder %v39, 4294967295
  %vm805 = vcmp.ne.s32.totalorder %v40, 4294967295
  %vm806 = vcmp.ne.s32.totalorder %v41, 4294967295
  %vm807 = vcmp.ne.s32.totalorder %v42, 4294967295
  %vm808 = vcmp.ne.s32.totalorder %v43, 4294967295
  %vm809 = vcmp.ne.s32.totalorder %v44, 4294967295
  %v810 = vsel %vm794, 1, 0
  %v811 = vsel %vm795, 1, 0
  %v812 = vsel %vm796, 1, 0
  %v813 = vsel %vm797, 1, 0
  %v814 = vsel %vm798, 1, 0
  %v815 = vsel %vm799, 1, 0
  %v816 = vsel %vm800, 1, 0
  %v817 = vsel %vm801, 1, 0
  %v818 = vsel %vm802, 1, 0
  %v819 = vsel %vm803, 1, 0
  %v820 = vsel %vm804, 1, 0
  %v821 = vsel %vm805, 1, 0
  %v822 = vsel %vm806, 1, 0
  %v823 = vsel %vm807, 1, 0
  %v824 = vsel %vm808, 1, 0
  %v825 = vsel %vm809, 1, 0
  %v826 = vcvt.s32.f32 %v810
  %v827 = vcvt.s32.f32 %v811
  %v828 = vcvt.s32.f32 %v812
  %v829 = vcvt.s32.f32 %v813
  %v830 = vcvt.s32.f32 %v814
  %v831 = vcvt.s32.f32 %v815
  %v832 = vcvt.s32.f32 %v816
  %v833 = vcvt.s32.f32 %v817
  %v834 = vcvt.s32.f32 %v818
  %v835 = vcvt.s32.f32 %v819
  %v836 = vcvt.s32.f32 %v820
  %v837 = vcvt.s32.f32 %v821
  %v838 = vcvt.s32.f32 %v822
  %v839 = vcvt.s32.f32 %v823
  %v840 = vcvt.s32.f32 %v824
  %v841 = vcvt.s32.f32 %v825
  %v842 = vsub.f32 %v616, %v748
  %v843 = vsub.f32 %v617, %v751
  %v844 = vsub.f32 %v618, %v754
  %v845 = vsub.f32 %v619, %v757
  %v846 = vsub.f32 %v620, %v760
  %v847 = vsub.f32 %v621, %v763
  %v848 = vsub.f32 %v622, %v766
  %v849 = vsub.f32 %v623, %v769
  %v850 = vsub.f32 %v624, %v772
  %v851 = vsub.f32 %v625, %v775
  %v852 = vsub.f32 %v626, %v778
  %v853 = vsub.f32 %v627, %v781
  %v854 = vsub.f32 %v628, %v784
  %v855 = vsub.f32 %v629, %v787
  %v856 = vsub.f32 %v630, %v790
  %v857 = vsub.f32 %v631, %v793
  %v858 = vmul.f32 %v842, %v826
  %v859 = vmul.f32 %v843, %v827
  %v860 = vmul.f32 %v844, %v828
  %v861 = vmul.f32 %v845, %v829
  %v862 = vmul.f32 %v846, %v830
  %v863 = vmul.f32 %v847, %v831
  %v864 = vmul.f32 %v848, %v832
  %v865 = vmul.f32 %v849, %v833
  %v866 = vmul.f32 %v850, %v834
  %v867 = vmul.f32 %v851, %v835
  %v868 = vmul.f32 %v852, %v836
  %v869 = vmul.f32 %v853, %v837
  %v870 = vmul.f32 %v854, %v838
  %v871 = vmul.f32 %v855, %v839
  %v872 = vmul.f32 %v856, %v840
  %v873 = vmul.f32 %v857, %v841
  %vm874 = vcmask 7168
  %v875 = vsel %vm874, %v858, 0.0
  %v876 = vsel %vm874, %v859, 0.0
  %v877 = vadd.f32 %v875, %v876
  %v878 = vsel %vm874, %v860, 0.0
  %v879 = vadd.f32 %v877, %v878
  %v880 = vsel %vm874, %v861, 0.0
  %v881 = vadd.f32 %v879, %v880
  %v882 = vsel %vm874, %v862, 0.0
  %v883 = vadd.f32 %v881, %v882
  %v884 = vsel %vm874, %v863, 0.0
  %v885 = vadd.f32 %v883, %v884
  %v886 = vsel %vm874, %v864, 0.0
  %v887 = vadd.f32 %v885, %v886
  %v888 = vsel %vm874, %v865, 0.0
  %v889 = vadd.f32 %v887, %v888
  %v890 = vsel %vm874, %v866, 0.0
  %v891 = vadd.f32 %v889, %v890
  %v892 = vsel %vm874, %v867, 0.0
  %v893 = vadd.f32 %v891, %v892
  %v894 = vsel %vm874, %v868, 0.0
  %v895 = vadd.f32 %v893, %v894
  %v896 = vsel %vm874, %v869, 0.0
  %v897 = vadd.f32 %v895, %v896
  %v898 = vsel %vm874, %v870, 0.0
  %v899 = vadd.f32 %v897, %v898
  %v900 = vsel %vm874, %v871, 0.0
  %v901 = vadd.f32 %v899, %v900
  %v902 = vsel %vm874, %v872, 0.0
  %v903 = vadd.f32 %v901, %v902
  %v904 = vsel %vm874, %v873, 0.0
  %v905 = vadd.f32 %v903, %v904
  %v906 = vrot.slane %v905, 4
  %v907 = vadd.f32 %v905, %v906
  %v908 = vrot.slane %v907, 2
  %v909 = vadd.f32 %v907, %v908
  %v910 = vrot.slane %v909, 1
  %v911 = vadd.f32 %v909, %v910
  %v912 = vsel %vm874, %v826, 0.0
  %v913 = vsel %vm874, %v827, 0.0
  %v914 = vadd.f32 %v912, %v913
  %v915 = vsel %vm874, %v828, 0.0
  %v916 = vadd.f32 %v914, %v915
  %v917 = vsel %vm874, %v829, 0.0
  %v918 = vadd.f32 %v916, %v917
  %v919 = vsel %vm874, %v830, 0.0
  %v920 = vadd.f32 %v918, %v919
  %v921 = vsel %vm874, %v831, 0.0
  %v922 = vadd.f32 %v920, %v921
  %v923 = vsel %vm874, %v832, 0.0
  %v924 = vadd.f32 %v922, %v923
  %v925 = vsel %vm874, %v833, 0.0
  %v926 = vadd.f32 %v924, %v925
  %v927 = vsel %vm874, %v834, 0.0
  %v928 = vadd.f32 %v926, %v927
  %v929 = vsel %vm874, %v835, 0.0
  %v930 = vadd.f32 %v928, %v929
  %v931 = vsel %vm874, %v836, 0.0
  %v932 = vadd.f32 %v930, %v931
  %v933 = vsel %vm874, %v837, 0.0
  %v934 = vadd.f32 %v932, %v933
  %v935 = vsel %vm874, %v838, 0.0
  %v936 = vadd.f32 %v934, %v935
  %v937 = vsel %vm874, %v839, 0.0
  %v938 = vadd.f32 %v936, %v937
  %v939 = vsel %vm874, %v840, 0.0
  %v940 = vadd.f32 %v938, %v939
  %v941 = vsel %vm874, %v841, 0.0
  %v942 = vadd.f32 %v940, %v941
  %v943 = vrot.slane %v942, 4
  %v944 = vadd.f32 %v942, %v943
  %v945 = vrot.slane %v944, 2
  %v946 = vadd.f32 %v944, %v945
  %v947 = vrot.slane %v946, 1
  %v948 = vadd.f32 %v946, %v947
  %v949 = vmax.f32 %v948, 1.0
  %v950 = vrcp.pop %v949
  %v951 = vmul.f32 %v911, %v950
  %v952 = vld [vmem:[%s6] sm:$0xff]
  %v953 = vld [vmem:[%s6 + $0x8] sm:$0xff]
  %v954 = vld [vmem:[%s6 + $0x10] sm:$0xff]
  %v955 = vld [vmem:[%s6 + $0x18] sm:$0xff]
  %v956 = vld [vmem:[%s6 + $0x20] sm:$0xff]
  %v957 = vld [vmem:[%s6 + $0x28] sm:$0xff]
  %v958 = vld [vmem:[%s6 + $0x30] sm:$0xff]
  %v959 = vld [vmem:[%s6 + $0x38] sm:$0xff]
  %v960 = vcvt.s32.f32 %v952
  %v961 = vcvt.s32.f32 %v953
  %v962 = vcvt.s32.f32 %v954
  %v963 = vcvt.s32.f32 %v955
  %v964 = vcvt.s32.f32 %v956
  %v965 = vcvt.s32.f32 %v957
  %v966 = vcvt.s32.f32 %v958
  %v967 = vcvt.s32.f32 %v959
  %v968 = vld [vmem:[%s4] sm:$0xff]
  %v969 = vld [vmem:[%s4 + $0x8] sm:$0xff]
  %v970 = vld [vmem:[%s4 + $0x10] sm:$0xff]
  %v971 = vld [vmem:[%s4 + $0x18] sm:$0xff]
  %v972 = vld [vmem:[%s4 + $0x20] sm:$0xff]
  %v973 = vld [vmem:[%s4 + $0x28] sm:$0xff]
  %v974 = vld [vmem:[%s4 + $0x30] sm:$0xff]
  %v975 = vld [vmem:[%s4 + $0x38] sm:$0xff]
  %v976 = vmul.u32 %v952, 4
  %v977 = vmul.u32 %v953, 4
  %v978 = vmul.u32 %v954, 4
  %v979 = vmul.u32 %v955, 4
  %v980 = vmul.u32 %v956, 4
  %v981 = vmul.u32 %v957, 4
  %v982 = vmul.u32 %v958, 4
  %v983 = vmul.u32 %v959, 4
  %984 = vset.pattern.permute.xlu0 0
  %985 = vperm.xlu0 %984, %v976
  %v986 = vpop.permute.xlu0 %985
  %987 = vset.pattern.permute.xlu0 0
  %988 = vperm.xlu0 %987, %v977
  %v989 = vpop.permute.xlu0 %988
  %990 = vset.pattern.permute.xlu0 0
  %991 = vperm.xlu0 %990, %v978
  %v992 = vpop.permute.xlu0 %991
  %993 = vset.pattern.permute.xlu0 0
  %994 = vperm.xlu0 %993, %v979
  %v995 = vpop.permute.xlu0 %994
  %996 = vset.pattern.permute.xlu0 0
  %997 = vperm.xlu0 %996, %v980
  %v998 = vpop.permute.xlu0 %997
  %999 = vset.pattern.permute.xlu0 0
  %1000 = vperm.xlu0 %999, %v981
  %v1001 = vpop.permute.xlu0 %1000
  %1002 = vset.pattern.permute.xlu0 0
  %1003 = vperm.xlu0 %1002, %v982
  %v1004 = vpop.permute.xlu0 %1003
  %1005 = vset.pattern.permute.xlu0 0
  %1006 = vperm.xlu0 %1005, %v983
  %v1007 = vpop.permute.xlu0 %1006
  %vm1008 = vcmp.eq.s32.totalorder %v633, %v986
  %vm1009 = vcmp.eq.s32.totalorder %v633, %v989
  %vm1010 = vcmp.eq.s32.totalorder %v633, %v992
  %vm1011 = vcmp.eq.s32.totalorder %v633, %v995
  %vm1012 = vcmp.eq.s32.totalorder %v633, %v998
  %vm1013 = vcmp.eq.s32.totalorder %v633, %v1001
  %vm1014 = vcmp.eq.s32.totalorder %v633, %v1004
  %vm1015 = vcmp.eq.s32.totalorder %v633, %v1007
  %v1016 = vsel %vm1008, 1, 0
  %v1017 = vsel %vm1009, 1, 0
  %v1018 = vsel %vm1010, 1, 0
  %v1019 = vsel %vm1011, 1, 0
  %v1020 = vsel %vm1012, 1, 0
  %v1021 = vsel %vm1013, 1, 0
  %v1022 = vsel %vm1014, 1, 0
  %v1023 = vsel %vm1015, 1, 0
  %v1024 = vcvt.s32.f32 %v1016
  %v1025 = vcvt.s32.f32 %v1017
  %v1026 = vcvt.s32.f32 %v1018
  %v1027 = vcvt.s32.f32 %v1019
  %v1028 = vcvt.s32.f32 %v1020
  %v1029 = vcvt.s32.f32 %v1021
  %v1030 = vcvt.s32.f32 %v1022
  %v1031 = vcvt.s32.f32 %v1023
  %v1032 = vmul.f32 %v968, %v1024
  %v1033 = vmul.f32 %v969, %v1025
  %v1034 = vmul.f32 %v970, %v1026
  %v1035 = vmul.f32 %v971, %v1027
  %v1036 = vmul.f32 %v972, %v1028
  %v1037 = vmul.f32 %v973, %v1029
  %v1038 = vmul.f32 %v974, %v1030
  %v1039 = vmul.f32 %v975, %v1031
  %vm1040 = vcmask 261120
  %v1041 = vsel %vm1040, %v1032, 0.0
  %1042 = vadd.xlane.f32.xlu0 %v1041
  %v1043 = vpop.xlane.xlu0 %1042
  %v1044 = vsel %vm1040, %v1033, 0.0
  %1045 = vadd.xlane.f32.xlu0 %v1044
  %v1046 = vpop.xlane.xlu0 %1045
  %v1047 = vsel %vm1040, %v1034, 0.0
  %1048 = vadd.xlane.f32.xlu0 %v1047
  %v1049 = vpop.xlane.xlu0 %1048
  %v1050 = vsel %vm1040, %v1035, 0.0
  %1051 = vadd.xlane.f32.xlu0 %v1050
  %v1052 = vpop.xlane.xlu0 %1051
  %v1053 = vsel %vm1040, %v1036, 0.0
  %1054 = vadd.xlane.f32.xlu0 %v1053
  %v1055 = vpop.xlane.xlu0 %1054
  %v1056 = vsel %vm1040, %v1037, 0.0
  %1057 = vadd.xlane.f32.xlu0 %v1056
  %v1058 = vpop.xlane.xlu0 %1057
  %v1059 = vsel %vm1040, %v1038, 0.0
  %1060 = vadd.xlane.f32.xlu0 %v1059
  %v1061 = vpop.xlane.xlu0 %1060
  %v1062 = vsel %vm1040, %v1039, 0.0
  %1063 = vadd.xlane.f32.xlu0 %v1062
  %v1064 = vpop.xlane.xlu0 %1063
  %v1065 = vld [vmem:[%s5] sm:$0xff]
  %v1066 = vld [vmem:[%s5 + $0x8] sm:$0xff]
  %v1067 = vld [vmem:[%s5 + $0x10] sm:$0xff]
  %v1068 = vld [vmem:[%s5 + $0x18] sm:$0xff]
  %v1069 = vld [vmem:[%s5 + $0x20] sm:$0xff]
  %v1070 = vld [vmem:[%s5 + $0x28] sm:$0xff]
  %v1071 = vld [vmem:[%s5 + $0x30] sm:$0xff]
  %v1072 = vld [vmem:[%s5 + $0x38] sm:$0xff]
  %v1073 = vsub.f32 %v1043, %v1065
  %v1074 = vsub.f32 %v1046, %v1066
  %v1075 = vsub.f32 %v1049, %v1067
  %v1076 = vsub.f32 %v1052, %v1068
  %v1077 = vsub.f32 %v1055, %v1069
  %v1078 = vsub.f32 %v1058, %v1070
  %v1079 = vsub.f32 %v1061, %v1071
  %v1080 = vsub.f32 %v1064, %v1072
  %v1081 = vmul.f32 %v1073, %v960
  %v1082 = vmul.f32 %v1074, %v961
  %v1083 = vmul.f32 %v1075, %v962
  %v1084 = vmul.f32 %v1076, %v963
  %v1085 = vmul.f32 %v1077, %v964
  %v1086 = vmul.f32 %v1078, %v965
  %v1087 = vmul.f32 %v1079, %v966
  %v1088 = vmul.f32 %v1080, %v967
  %v1089 = vand.u32 2147483647, %v1081
  %v1090 = vand.u32 2147483647, %v1082
  %v1091 = vand.u32 2147483647, %v1083
  %v1092 = vand.u32 2147483647, %v1084
  %v1093 = vand.u32 2147483647, %v1085
  %v1094 = vand.u32 2147483647, %v1086
  %v1095 = vand.u32 2147483647, %v1087
  %v1096 = vand.u32 2147483647, %v1088
  %vm1097 = vcmp.lt.f32.partialorder %v1089, 1.0
  %vm1098 = vcmp.lt.f32.partialorder %v1090, 1.0
  %vm1099 = vcmp.lt.f32.partialorder %v1091, 1.0
  %vm1100 = vcmp.lt.f32.partialorder %v1092, 1.0
  %vm1101 = vcmp.lt.f32.partialorder %v1093, 1.0
  %vm1102 = vcmp.lt.f32.partialorder %v1094, 1.0
  %vm1103 = vcmp.lt.f32.partialorder %v1095, 1.0
  %vm1104 = vcmp.lt.f32.partialorder %v1096, 1.0
  %v1105 = vsel %vm1097, 1, 0
  %v1106 = vsel %vm1098, 1, 0
  %v1107 = vsel %vm1099, 1, 0
  %v1108 = vsel %vm1100, 1, 0
  %v1109 = vsel %vm1101, 1, 0
  %v1110 = vsel %vm1102, 1, 0
  %v1111 = vsel %vm1103, 1, 0
  %v1112 = vsel %vm1104, 1, 0
  %v1113 = vcvt.s32.f32 %v1105
  %v1114 = vcvt.s32.f32 %v1106
  %v1115 = vcvt.s32.f32 %v1107
  %v1116 = vcvt.s32.f32 %v1108
  %v1117 = vcvt.s32.f32 %v1109
  %v1118 = vcvt.s32.f32 %v1110
  %v1119 = vcvt.s32.f32 %v1111
  %v1120 = vcvt.s32.f32 %v1112
  %v1121 = vmul.f32 %v1089, 0.5
  %v1122 = vmul.f32 %v1090, 0.5
  %v1123 = vmul.f32 %v1091, 0.5
  %v1124 = vmul.f32 %v1092, 0.5
  %v1125 = vmul.f32 %v1093, 0.5
  %v1126 = vmul.f32 %v1094, 0.5
  %v1127 = vmul.f32 %v1095, 0.5
  %v1128 = vmul.f32 %v1096, 0.5
  %v1129 = vmul.f32 %v1121, %v1089
  %v1130 = vmul.f32 %v1122, %v1090
  %v1131 = vmul.f32 %v1123, %v1091
  %v1132 = vmul.f32 %v1124, %v1092
  %v1133 = vmul.f32 %v1125, %v1093
  %v1134 = vmul.f32 %v1126, %v1094
  %v1135 = vmul.f32 %v1127, %v1095
  %v1136 = vmul.f32 %v1128, %v1096
  %v1137 = vmul.f32 %v1113, %v1129
  %v1138 = vmul.f32 %v1114, %v1130
  %v1139 = vmul.f32 %v1115, %v1131
  %v1140 = vmul.f32 %v1116, %v1132
  %v1141 = vmul.f32 %v1117, %v1133
  %v1142 = vmul.f32 %v1118, %v1134
  %v1143 = vmul.f32 %v1119, %v1135
  %v1144 = vmul.f32 %v1120, %v1136
  %v1145 = vsub.f32 1.0, %v1113
  %v1146 = vsub.f32 1.0, %v1114
  %v1147 = vsub.f32 1.0, %v1115
  %v1148 = vsub.f32 1.0, %v1116
  %v1149 = vsub.f32 1.0, %v1117
  %v1150 = vsub.f32 1.0, %v1118
  %v1151 = vsub.f32 1.0, %v1119
  %v1152 = vsub.f32 1.0, %v1120
  %v1153 = vsub.f32 %v1089, 0.5
  %v1154 = vsub.f32 %v1090, 0.5
  %v1155 = vsub.f32 %v1091, 0.5
  %v1156 = vsub.f32 %v1092, 0.5
  %v1157 = vsub.f32 %v1093, 0.5
  %v1158 = vsub.f32 %v1094, 0.5
  %v1159 = vsub.f32 %v1095, 0.5
  %v1160 = vsub.f32 %v1096, 0.5
  %v1161 = vmul.f32 %v1145, %v1153
  %v1162 = vmul.f32 %v1146, %v1154
  %v1163 = vmul.f32 %v1147, %v1155
  %v1164 = vmul.f32 %v1148, %v1156
  %v1165 = vmul.f32 %v1149, %v1157
  %v1166 = vmul.f32 %v1150, %v1158
  %v1167 = vmul.f32 %v1151, %v1159
  %v1168 = vmul.f32 %v1152, %v1160
  %v1169 = vadd.f32 %v1137, %v1161
  %v1170 = vadd.f32 %v1138, %v1162
  %v1171 = vadd.f32 %v1139, %v1163
  %v1172 = vadd.f32 %v1140, %v1164
  %v1173 = vadd.f32 %v1141, %v1165
  %v1174 = vadd.f32 %v1142, %v1166
  %v1175 = vadd.f32 %v1143, %v1167
  %v1176 = vadd.f32 %v1144, %v1168
  %v1177 = vsel %vm874, %v1169, 0.0
  %v1178 = vsel %vm874, %v1170, 0.0
  %v1179 = vadd.f32 %v1177, %v1178
  %v1180 = vsel %vm874, %v1171, 0.0
  %v1181 = vadd.f32 %v1179, %v1180
  %v1182 = vsel %vm874, %v1172, 0.0
  %v1183 = vadd.f32 %v1181, %v1182
  %v1184 = vsel %vm874, %v1173, 0.0
  %v1185 = vadd.f32 %v1183, %v1184
  %v1186 = vsel %vm874, %v1174, 0.0
  %v1187 = vadd.f32 %v1185, %v1186
  %v1188 = vsel %vm874, %v1175, 0.0
  %v1189 = vadd.f32 %v1187, %v1188
  %v1190 = vsel %vm874, %v1176, 0.0
  %v1191 = vadd.f32 %v1189, %v1190
  %1192 = vadd.xlane.f32.xlu0 %v1191
  %v1193 = vpop.xlane.xlu0 %1192
  %v1194 = vrot.slane %v1193, 4
  %v1195 = vadd.f32 %v1193, %v1194
  %v1196 = vrot.slane %v1195, 2
  %v1197 = vadd.f32 %v1195, %v1196
  %v1198 = vrot.slane %v1197, 1
  %v1199 = vadd.f32 %v1197, %v1198
  %s1200 = vtos %v1199
  %s1201 = sadd.f32 %s1200, 0.0
  %v1202 = vadd.s32 %v976, 1
  %v1203 = vadd.s32 %v977, 1
  %v1204 = vadd.s32 %v978, 1
  %v1205 = vadd.s32 %v979, 1
  %v1206 = vadd.s32 %v980, 1
  %v1207 = vadd.s32 %v981, 1
  %v1208 = vadd.s32 %v982, 1
  %v1209 = vadd.s32 %v983, 1
  %1210 = vset.pattern.permute.xlu0 0
  %1211 = vperm.xlu0 %1210, %v1202
  %v1212 = vpop.permute.xlu0 %1211
  %1213 = vset.pattern.permute.xlu0 0
  %1214 = vperm.xlu0 %1213, %v1203
  %v1215 = vpop.permute.xlu0 %1214
  %1216 = vset.pattern.permute.xlu0 0
  %1217 = vperm.xlu0 %1216, %v1204
  %v1218 = vpop.permute.xlu0 %1217
  %1219 = vset.pattern.permute.xlu0 0
  %1220 = vperm.xlu0 %1219, %v1205
  %v1221 = vpop.permute.xlu0 %1220
  %1222 = vset.pattern.permute.xlu0 0
  %1223 = vperm.xlu0 %1222, %v1206
  %v1224 = vpop.permute.xlu0 %1223
  %1225 = vset.pattern.permute.xlu0 0
  %1226 = vperm.xlu0 %1225, %v1207
  %v1227 = vpop.permute.xlu0 %1226
  %1228 = vset.pattern.permute.xlu0 0
  %1229 = vperm.xlu0 %1228, %v1208
  %v1230 = vpop.permute.xlu0 %1229
  %1231 = vset.pattern.permute.xlu0 0
  %1232 = vperm.xlu0 %1231, %v1209
  %v1233 = vpop.permute.xlu0 %1232
  %vm1234 = vcmp.eq.s32.totalorder %v633, %v1212
  %vm1235 = vcmp.eq.s32.totalorder %v633, %v1215
  %vm1236 = vcmp.eq.s32.totalorder %v633, %v1218
  %vm1237 = vcmp.eq.s32.totalorder %v633, %v1221
  %vm1238 = vcmp.eq.s32.totalorder %v633, %v1224
  %vm1239 = vcmp.eq.s32.totalorder %v633, %v1227
  %vm1240 = vcmp.eq.s32.totalorder %v633, %v1230
  %vm1241 = vcmp.eq.s32.totalorder %v633, %v1233
  %v1242 = vsel %vm1234, 1, 0
  %v1243 = vsel %vm1235, 1, 0
  %v1244 = vsel %vm1236, 1, 0
  %v1245 = vsel %vm1237, 1, 0
  %v1246 = vsel %vm1238, 1, 0
  %v1247 = vsel %vm1239, 1, 0
  %v1248 = vsel %vm1240, 1, 0
  %v1249 = vsel %vm1241, 1, 0
  %v1250 = vcvt.s32.f32 %v1242
  %v1251 = vcvt.s32.f32 %v1243
  %v1252 = vcvt.s32.f32 %v1244
  %v1253 = vcvt.s32.f32 %v1245
  %v1254 = vcvt.s32.f32 %v1246
  %v1255 = vcvt.s32.f32 %v1247
  %v1256 = vcvt.s32.f32 %v1248
  %v1257 = vcvt.s32.f32 %v1249
  %v1258 = vmul.f32 %v968, %v1250
  %v1259 = vmul.f32 %v969, %v1251
  %v1260 = vmul.f32 %v970, %v1252
  %v1261 = vmul.f32 %v971, %v1253
  %v1262 = vmul.f32 %v972, %v1254
  %v1263 = vmul.f32 %v973, %v1255
  %v1264 = vmul.f32 %v974, %v1256
  %v1265 = vmul.f32 %v975, %v1257
  %v1266 = vsel %vm1040, %v1258, 0.0
  %1267 = vadd.xlane.f32.xlu0 %v1266
  %v1268 = vpop.xlane.xlu0 %1267
  %v1269 = vsel %vm1040, %v1259, 0.0
  %1270 = vadd.xlane.f32.xlu0 %v1269
  %v1271 = vpop.xlane.xlu0 %1270
  %v1272 = vsel %vm1040, %v1260, 0.0
  %1273 = vadd.xlane.f32.xlu0 %v1272
  %v1274 = vpop.xlane.xlu0 %1273
  %v1275 = vsel %vm1040, %v1261, 0.0
  %1276 = vadd.xlane.f32.xlu0 %v1275
  %v1277 = vpop.xlane.xlu0 %1276
  %v1278 = vsel %vm1040, %v1262, 0.0
  %1279 = vadd.xlane.f32.xlu0 %v1278
  %v1280 = vpop.xlane.xlu0 %1279
  %v1281 = vsel %vm1040, %v1263, 0.0
  %1282 = vadd.xlane.f32.xlu0 %v1281
  %v1283 = vpop.xlane.xlu0 %1282
  %v1284 = vsel %vm1040, %v1264, 0.0
  %1285 = vadd.xlane.f32.xlu0 %v1284
  %v1286 = vpop.xlane.xlu0 %1285
  %v1287 = vsel %vm1040, %v1265, 0.0
  %1288 = vadd.xlane.f32.xlu0 %v1287
  %v1289 = vpop.xlane.xlu0 %1288
  %v1290 = vsub.f32 %v1268, %v1065
  %v1291 = vsub.f32 %v1271, %v1066
  %v1292 = vsub.f32 %v1274, %v1067
  %v1293 = vsub.f32 %v1277, %v1068
  %v1294 = vsub.f32 %v1280, %v1069
  %v1295 = vsub.f32 %v1283, %v1070
  %v1296 = vsub.f32 %v1286, %v1071
  %v1297 = vsub.f32 %v1289, %v1072
  %1306 = vrot.lane.b32.xlu0 %v960, 1
  %v1307 = vpop.permute.xlu0 %1306
  %1308 = vrot.lane.b32.xlu0 %v961, 1
  %v1309 = vpop.permute.xlu0 %1308
  %1310 = vrot.lane.b32.xlu0 %v962, 1
  %v1311 = vpop.permute.xlu0 %1310
  %1312 = vrot.lane.b32.xlu0 %v963, 1
  %v1313 = vpop.permute.xlu0 %1312
  %1314 = vrot.lane.b32.xlu0 %v964, 1
  %v1315 = vpop.permute.xlu0 %1314
  %1316 = vrot.lane.b32.xlu0 %v965, 1
  %v1317 = vpop.permute.xlu0 %1316
  %1318 = vrot.lane.b32.xlu0 %v966, 1
  %v1319 = vpop.permute.xlu0 %1318
  %1320 = vrot.lane.b32.xlu0 %v967, 1
  %v1321 = vpop.permute.xlu0 %1320
  %v1330 = vmul.f32 %v1290, %v1307
  %v1331 = vmul.f32 %v1291, %v1309
  %v1332 = vmul.f32 %v1292, %v1311
  %v1333 = vmul.f32 %v1293, %v1313
  %v1334 = vmul.f32 %v1294, %v1315
  %v1335 = vmul.f32 %v1295, %v1317
  %v1336 = vmul.f32 %v1296, %v1319
  %v1337 = vmul.f32 %v1297, %v1321
  %v1338 = vand.u32 2147483647, %v1330
  %v1339 = vand.u32 2147483647, %v1331
  %v1340 = vand.u32 2147483647, %v1332
  %v1341 = vand.u32 2147483647, %v1333
  %v1342 = vand.u32 2147483647, %v1334
  %v1343 = vand.u32 2147483647, %v1335
  %v1344 = vand.u32 2147483647, %v1336
  %v1345 = vand.u32 2147483647, %v1337
  %vm1346 = vcmp.lt.f32.partialorder %v1338, 1.0
  %vm1347 = vcmp.lt.f32.partialorder %v1339, 1.0
  %vm1348 = vcmp.lt.f32.partialorder %v1340, 1.0
  %vm1349 = vcmp.lt.f32.partialorder %v1341, 1.0
  %vm1350 = vcmp.lt.f32.partialorder %v1342, 1.0
  %vm1351 = vcmp.lt.f32.partialorder %v1343, 1.0
  %vm1352 = vcmp.lt.f32.partialorder %v1344, 1.0
  %vm1353 = vcmp.lt.f32.partialorder %v1345, 1.0
  %v1354 = vsel %vm1346, 1, 0
  %v1355 = vsel %vm1347, 1, 0
  %v1356 = vsel %vm1348, 1, 0
  %v1357 = vsel %vm1349, 1, 0
  %v1358 = vsel %vm1350, 1, 0
  %v1359 = vsel %vm1351, 1, 0
  %v1360 = vsel %vm1352, 1, 0
  %v1361 = vsel %vm1353, 1, 0
  %v1362 = vcvt.s32.f32 %v1354
  %v1363 = vcvt.s32.f32 %v1355
  %v1364 = vcvt.s32.f32 %v1356
  %v1365 = vcvt.s32.f32 %v1357
  %v1366 = vcvt.s32.f32 %v1358
  %v1367 = vcvt.s32.f32 %v1359
  %v1368 = vcvt.s32.f32 %v1360
  %v1369 = vcvt.s32.f32 %v1361
  %v1370 = vmul.f32 %v1338, 0.5
  %v1371 = vmul.f32 %v1339, 0.5
  %v1372 = vmul.f32 %v1340, 0.5
  %v1373 = vmul.f32 %v1341, 0.5
  %v1374 = vmul.f32 %v1342, 0.5
  %v1375 = vmul.f32 %v1343, 0.5
  %v1376 = vmul.f32 %v1344, 0.5
  %v1377 = vmul.f32 %v1345, 0.5
  %v1378 = vmul.f32 %v1370, %v1338
  %v1379 = vmul.f32 %v1371, %v1339
  %v1380 = vmul.f32 %v1372, %v1340
  %v1381 = vmul.f32 %v1373, %v1341
  %v1382 = vmul.f32 %v1374, %v1342
  %v1383 = vmul.f32 %v1375, %v1343
  %v1384 = vmul.f32 %v1376, %v1344
  %v1385 = vmul.f32 %v1377, %v1345
  %v1386 = vmul.f32 %v1362, %v1378
  %v1387 = vmul.f32 %v1363, %v1379
  %v1388 = vmul.f32 %v1364, %v1380
  %v1389 = vmul.f32 %v1365, %v1381
  %v1390 = vmul.f32 %v1366, %v1382
  %v1391 = vmul.f32 %v1367, %v1383
  %v1392 = vmul.f32 %v1368, %v1384
  %v1393 = vmul.f32 %v1369, %v1385
  %v1394 = vsub.f32 1.0, %v1362
  %v1395 = vsub.f32 1.0, %v1363
  %v1396 = vsub.f32 1.0, %v1364
  %v1397 = vsub.f32 1.0, %v1365
  %v1398 = vsub.f32 1.0, %v1366
  %v1399 = vsub.f32 1.0, %v1367
  %v1400 = vsub.f32 1.0, %v1368
  %v1401 = vsub.f32 1.0, %v1369
  %v1402 = vsub.f32 %v1338, 0.5
  %v1403 = vsub.f32 %v1339, 0.5
  %v1404 = vsub.f32 %v1340, 0.5
  %v1405 = vsub.f32 %v1341, 0.5
  %v1406 = vsub.f32 %v1342, 0.5
  %v1407 = vsub.f32 %v1343, 0.5
  %v1408 = vsub.f32 %v1344, 0.5
  %v1409 = vsub.f32 %v1345, 0.5
  %v1410 = vmul.f32 %v1394, %v1402
  %v1411 = vmul.f32 %v1395, %v1403
  %v1412 = vmul.f32 %v1396, %v1404
  %v1413 = vmul.f32 %v1397, %v1405
  %v1414 = vmul.f32 %v1398, %v1406
  %v1415 = vmul.f32 %v1399, %v1407
  %v1416 = vmul.f32 %v1400, %v1408
  %v1417 = vmul.f32 %v1401, %v1409
  %v1418 = vadd.f32 %v1386, %v1410
  %v1419 = vadd.f32 %v1387, %v1411
  %v1420 = vadd.f32 %v1388, %v1412
  %v1421 = vadd.f32 %v1389, %v1413
  %v1422 = vadd.f32 %v1390, %v1414
  %v1423 = vadd.f32 %v1391, %v1415
  %v1424 = vadd.f32 %v1392, %v1416
  %v1425 = vadd.f32 %v1393, %v1417
  %1434 = vrot.lane.b32.xlu0 %v1418, 127
  %v1435 = vpop.permute.xlu0 %1434
  %1436 = vrot.lane.b32.xlu0 %v1419, 127
  %v1437 = vpop.permute.xlu0 %1436
  %1438 = vrot.lane.b32.xlu0 %v1420, 127
  %v1439 = vpop.permute.xlu0 %1438
  %1440 = vrot.lane.b32.xlu0 %v1421, 127
  %v1441 = vpop.permute.xlu0 %1440
  %1442 = vrot.lane.b32.xlu0 %v1422, 127
  %v1443 = vpop.permute.xlu0 %1442
  %1444 = vrot.lane.b32.xlu0 %v1423, 127
  %v1445 = vpop.permute.xlu0 %1444
  %1446 = vrot.lane.b32.xlu0 %v1424, 127
  %v1447 = vpop.permute.xlu0 %1446
  %1448 = vrot.lane.b32.xlu0 %v1425, 127
  %v1449 = vpop.permute.xlu0 %1448
  %v1458 = vsel %vm874, %v1435, 0.0
  %v1459 = vsel %vm874, %v1437, 0.0
  %v1460 = vadd.f32 %v1458, %v1459
  %v1461 = vsel %vm874, %v1439, 0.0
  %v1462 = vadd.f32 %v1460, %v1461
  %v1463 = vsel %vm874, %v1441, 0.0
  %v1464 = vadd.f32 %v1462, %v1463
  %v1465 = vsel %vm874, %v1443, 0.0
  %v1466 = vadd.f32 %v1464, %v1465
  %v1467 = vsel %vm874, %v1445, 0.0
  %v1468 = vadd.f32 %v1466, %v1467
  %v1469 = vsel %vm874, %v1447, 0.0
  %v1470 = vadd.f32 %v1468, %v1469
  %v1471 = vsel %vm874, %v1449, 0.0
  %v1472 = vadd.f32 %v1470, %v1471
  %1473 = vadd.xlane.f32.xlu0 %v1472
  %v1474 = vpop.xlane.xlu0 %1473
  %v1475 = vrot.slane %v1474, 4
  %v1476 = vadd.f32 %v1474, %v1475
  %v1477 = vrot.slane %v1476, 2
  %v1478 = vadd.f32 %v1476, %v1477
  %v1479 = vrot.slane %v1478, 1
  %v1480 = vadd.f32 %v1478, %v1479
  %s1481 = vtos %v1480
  %s1482 = sadd.f32 %s1201, %s1481
  %v1483 = vadd.s32 %v976, 2
  %v1484 = vadd.s32 %v977, 2
  %v1485 = vadd.s32 %v978, 2
  %v1486 = vadd.s32 %v979, 2
  %v1487 = vadd.s32 %v980, 2
  %v1488 = vadd.s32 %v981, 2
  %v1489 = vadd.s32 %v982, 2
  %v1490 = vadd.s32 %v983, 2
  %1491 = vset.pattern.permute.xlu0 0
  %1492 = vperm.xlu0 %1491, %v1483
  %v1493 = vpop.permute.xlu0 %1492
  %1494 = vset.pattern.permute.xlu0 0
  %1495 = vperm.xlu0 %1494, %v1484
  %v1496 = vpop.permute.xlu0 %1495
  %1497 = vset.pattern.permute.xlu0 0
  %1498 = vperm.xlu0 %1497, %v1485
  %v1499 = vpop.permute.xlu0 %1498
  %1500 = vset.pattern.permute.xlu0 0
  %1501 = vperm.xlu0 %1500, %v1486
  %v1502 = vpop.permute.xlu0 %1501
  %1503 = vset.pattern.permute.xlu0 0
  %1504 = vperm.xlu0 %1503, %v1487
  %v1505 = vpop.permute.xlu0 %1504
  %1506 = vset.pattern.permute.xlu0 0
  %1507 = vperm.xlu0 %1506, %v1488
  %v1508 = vpop.permute.xlu0 %1507
  %1509 = vset.pattern.permute.xlu0 0
  %1510 = vperm.xlu0 %1509, %v1489
  %v1511 = vpop.permute.xlu0 %1510
  %1512 = vset.pattern.permute.xlu0 0
  %1513 = vperm.xlu0 %1512, %v1490
  %v1514 = vpop.permute.xlu0 %1513
  %vm1515 = vcmp.eq.s32.totalorder %v633, %v1493
  %vm1516 = vcmp.eq.s32.totalorder %v633, %v1496
  %vm1517 = vcmp.eq.s32.totalorder %v633, %v1499
  %vm1518 = vcmp.eq.s32.totalorder %v633, %v1502
  %vm1519 = vcmp.eq.s32.totalorder %v633, %v1505
  %vm1520 = vcmp.eq.s32.totalorder %v633, %v1508
  %vm1521 = vcmp.eq.s32.totalorder %v633, %v1511
  %vm1522 = vcmp.eq.s32.totalorder %v633, %v1514
  %v1523 = vsel %vm1515, 1, 0
  %v1524 = vsel %vm1516, 1, 0
  %v1525 = vsel %vm1517, 1, 0
  %v1526 = vsel %vm1518, 1, 0
  %v1527 = vsel %vm1519, 1, 0
  %v1528 = vsel %vm1520, 1, 0
  %v1529 = vsel %vm1521, 1, 0
  %v1530 = vsel %vm1522, 1, 0
  %v1531 = vcvt.s32.f32 %v1523
  %v1532 = vcvt.s32.f32 %v1524
  %v1533 = vcvt.s32.f32 %v1525
  %v1534 = vcvt.s32.f32 %v1526
  %v1535 = vcvt.s32.f32 %v1527
  %v1536 = vcvt.s32.f32 %v1528
  %v1537 = vcvt.s32.f32 %v1529
  %v1538 = vcvt.s32.f32 %v1530
  %v1539 = vmul.f32 %v968, %v1531
  %v1540 = vmul.f32 %v969, %v1532
  %v1541 = vmul.f32 %v970, %v1533
  %v1542 = vmul.f32 %v971, %v1534
  %v1543 = vmul.f32 %v972, %v1535
  %v1544 = vmul.f32 %v973, %v1536
  %v1545 = vmul.f32 %v974, %v1537
  %v1546 = vmul.f32 %v975, %v1538
  %v1547 = vsel %vm1040, %v1539, 0.0
  %1548 = vadd.xlane.f32.xlu0 %v1547
  %v1549 = vpop.xlane.xlu0 %1548
  %v1550 = vsel %vm1040, %v1540, 0.0
  %1551 = vadd.xlane.f32.xlu0 %v1550
  %v1552 = vpop.xlane.xlu0 %1551
  %v1553 = vsel %vm1040, %v1541, 0.0
  %1554 = vadd.xlane.f32.xlu0 %v1553
  %v1555 = vpop.xlane.xlu0 %1554
  %v1556 = vsel %vm1040, %v1542, 0.0
  %1557 = vadd.xlane.f32.xlu0 %v1556
  %v1558 = vpop.xlane.xlu0 %1557
  %v1559 = vsel %vm1040, %v1543, 0.0
  %1560 = vadd.xlane.f32.xlu0 %v1559
  %v1561 = vpop.xlane.xlu0 %1560
  %v1562 = vsel %vm1040, %v1544, 0.0
  %1563 = vadd.xlane.f32.xlu0 %v1562
  %v1564 = vpop.xlane.xlu0 %1563
  %v1565 = vsel %vm1040, %v1545, 0.0
  %1566 = vadd.xlane.f32.xlu0 %v1565
  %v1567 = vpop.xlane.xlu0 %1566
  %v1568 = vsel %vm1040, %v1546, 0.0
  %1569 = vadd.xlane.f32.xlu0 %v1568
  %v1570 = vpop.xlane.xlu0 %1569
  %v1571 = vsub.f32 %v1549, %v1065
  %v1572 = vsub.f32 %v1552, %v1066
  %v1573 = vsub.f32 %v1555, %v1067
  %v1574 = vsub.f32 %v1558, %v1068
  %v1575 = vsub.f32 %v1561, %v1069
  %v1576 = vsub.f32 %v1564, %v1070
  %v1577 = vsub.f32 %v1567, %v1071
  %v1578 = vsub.f32 %v1570, %v1072
  %1579 = vrot.lane.b32.xlu0 %v960, 2
  %v1580 = vpop.permute.xlu0 %1579
  %1581 = vrot.lane.b32.xlu0 %v961, 2
  %v1582 = vpop.permute.xlu0 %1581
  %1583 = vrot.lane.b32.xlu0 %v962, 2
  %v1584 = vpop.permute.xlu0 %1583
  %1585 = vrot.lane.b32.xlu0 %v963, 2
  %v1586 = vpop.permute.xlu0 %1585
  %1587 = vrot.lane.b32.xlu0 %v964, 2
  %v1588 = vpop.permute.xlu0 %1587
  %1589 = vrot.lane.b32.xlu0 %v965, 2
  %v1590 = vpop.permute.xlu0 %1589
  %1591 = vrot.lane.b32.xlu0 %v966, 2
  %v1592 = vpop.permute.xlu0 %1591
  %1593 = vrot.lane.b32.xlu0 %v967, 2
  %v1594 = vpop.permute.xlu0 %1593
  %v1603 = vmul.f32 %v1571, %v1580
  %v1604 = vmul.f32 %v1572, %v1582
  %v1605 = vmul.f32 %v1573, %v1584
  %v1606 = vmul.f32 %v1574, %v1586
  %v1607 = vmul.f32 %v1575, %v1588
  %v1608 = vmul.f32 %v1576, %v1590
  %v1609 = vmul.f32 %v1577, %v1592
  %v1610 = vmul.f32 %v1578, %v1594
  %v1611 = vand.u32 2147483647, %v1603
  %v1612 = vand.u32 2147483647, %v1604
  %v1613 = vand.u32 2147483647, %v1605
  %v1614 = vand.u32 2147483647, %v1606
  %v1615 = vand.u32 2147483647, %v1607
  %v1616 = vand.u32 2147483647, %v1608
  %v1617 = vand.u32 2147483647, %v1609
  %v1618 = vand.u32 2147483647, %v1610
  %vm1619 = vcmp.lt.f32.partialorder %v1611, 1.0
  %vm1620 = vcmp.lt.f32.partialorder %v1612, 1.0
  %vm1621 = vcmp.lt.f32.partialorder %v1613, 1.0
  %vm1622 = vcmp.lt.f32.partialorder %v1614, 1.0
  %vm1623 = vcmp.lt.f32.partialorder %v1615, 1.0
  %vm1624 = vcmp.lt.f32.partialorder %v1616, 1.0
  %vm1625 = vcmp.lt.f32.partialorder %v1617, 1.0
  %vm1626 = vcmp.lt.f32.partialorder %v1618, 1.0
  %v1627 = vsel %vm1619, 1, 0
  %v1628 = vsel %vm1620, 1, 0
  %v1629 = vsel %vm1621, 1, 0
  %v1630 = vsel %vm1622, 1, 0
  %v1631 = vsel %vm1623, 1, 0
  %v1632 = vsel %vm1624, 1, 0
  %v1633 = vsel %vm1625, 1, 0
  %v1634 = vsel %vm1626, 1, 0
  %v1635 = vcvt.s32.f32 %v1627
  %v1636 = vcvt.s32.f32 %v1628
  %v1637 = vcvt.s32.f32 %v1629
  %v1638 = vcvt.s32.f32 %v1630
  %v1639 = vcvt.s32.f32 %v1631
  %v1640 = vcvt.s32.f32 %v1632
  %v1641 = vcvt.s32.f32 %v1633
  %v1642 = vcvt.s32.f32 %v1634
  %v1643 = vmul.f32 %v1611, 0.5
  %v1644 = vmul.f32 %v1612, 0.5
  %v1645 = vmul.f32 %v1613, 0.5
  %v1646 = vmul.f32 %v1614, 0.5
  %v1647 = vmul.f32 %v1615, 0.5
  %v1648 = vmul.f32 %v1616, 0.5
  %v1649 = vmul.f32 %v1617, 0.5
  %v1650 = vmul.f32 %v1618, 0.5
  %v1651 = vmul.f32 %v1643, %v1611
  %v1652 = vmul.f32 %v1644, %v1612
  %v1653 = vmul.f32 %v1645, %v1613
  %v1654 = vmul.f32 %v1646, %v1614
  %v1655 = vmul.f32 %v1647, %v1615
  %v1656 = vmul.f32 %v1648, %v1616
  %v1657 = vmul.f32 %v1649, %v1617
  %v1658 = vmul.f32 %v1650, %v1618
  %v1659 = vmul.f32 %v1635, %v1651
  %v1660 = vmul.f32 %v1636, %v1652
  %v1661 = vmul.f32 %v1637, %v1653
  %v1662 = vmul.f32 %v1638, %v1654
  %v1663 = vmul.f32 %v1639, %v1655
  %v1664 = vmul.f32 %v1640, %v1656
  %v1665 = vmul.f32 %v1641, %v1657
  %v1666 = vmul.f32 %v1642, %v1658
  %v1667 = vsub.f32 1.0, %v1635
  %v1668 = vsub.f32 1.0, %v1636
  %v1669 = vsub.f32 1.0, %v1637
  %v1670 = vsub.f32 1.0, %v1638
  %v1671 = vsub.f32 1.0, %v1639
  %v1672 = vsub.f32 1.0, %v1640
  %v1673 = vsub.f32 1.0, %v1641
  %v1674 = vsub.f32 1.0, %v1642
  %v1675 = vsub.f32 %v1611, 0.5
  %v1676 = vsub.f32 %v1612, 0.5
  %v1677 = vsub.f32 %v1613, 0.5
  %v1678 = vsub.f32 %v1614, 0.5
  %v1679 = vsub.f32 %v1615, 0.5
  %v1680 = vsub.f32 %v1616, 0.5
  %v1681 = vsub.f32 %v1617, 0.5
  %v1682 = vsub.f32 %v1618, 0.5
  %v1683 = vmul.f32 %v1667, %v1675
  %v1684 = vmul.f32 %v1668, %v1676
  %v1685 = vmul.f32 %v1669, %v1677
  %v1686 = vmul.f32 %v1670, %v1678
  %v1687 = vmul.f32 %v1671, %v1679
  %v1688 = vmul.f32 %v1672, %v1680
  %v1689 = vmul.f32 %v1673, %v1681
  %v1690 = vmul.f32 %v1674, %v1682
  %v1691 = vadd.f32 %v1659, %v1683
  %v1692 = vadd.f32 %v1660, %v1684
  %v1693 = vadd.f32 %v1661, %v1685
  %v1694 = vadd.f32 %v1662, %v1686
  %v1695 = vadd.f32 %v1663, %v1687
  %v1696 = vadd.f32 %v1664, %v1688
  %v1697 = vadd.f32 %v1665, %v1689
  %v1698 = vadd.f32 %v1666, %v1690
  %1707 = vrot.lane.b32.xlu0 %v1691, 126
  %v1708 = vpop.permute.xlu0 %1707
  %1709 = vrot.lane.b32.xlu0 %v1692, 126
  %v1710 = vpop.permute.xlu0 %1709
  %1711 = vrot.lane.b32.xlu0 %v1693, 126
  %v1712 = vpop.permute.xlu0 %1711
  %1713 = vrot.lane.b32.xlu0 %v1694, 126
  %v1714 = vpop.permute.xlu0 %1713
  %1715 = vrot.lane.b32.xlu0 %v1695, 126
  %v1716 = vpop.permute.xlu0 %1715
  %1717 = vrot.lane.b32.xlu0 %v1696, 126
  %v1718 = vpop.permute.xlu0 %1717
  %1719 = vrot.lane.b32.xlu0 %v1697, 126
  %v1720 = vpop.permute.xlu0 %1719
  %1721 = vrot.lane.b32.xlu0 %v1698, 126
  %v1722 = vpop.permute.xlu0 %1721
  %v1731 = vsel %vm874, %v1708, 0.0
  %v1732 = vsel %vm874, %v1710, 0.0
  %v1733 = vadd.f32 %v1731, %v1732
  %v1734 = vsel %vm874, %v1712, 0.0
  %v1735 = vadd.f32 %v1733, %v1734
  %v1736 = vsel %vm874, %v1714, 0.0
  %v1737 = vadd.f32 %v1735, %v1736
  %v1738 = vsel %vm874, %v1716, 0.0
  %v1739 = vadd.f32 %v1737, %v1738
  %v1740 = vsel %vm874, %v1718, 0.0
  %v1741 = vadd.f32 %v1739, %v1740
  %v1742 = vsel %vm874, %v1720, 0.0
  %v1743 = vadd.f32 %v1741, %v1742
  %v1744 = vsel %vm874, %v1722, 0.0
  %v1745 = vadd.f32 %v1743, %v1744
  %1746 = vadd.xlane.f32.xlu0 %v1745
  %v1747 = vpop.xlane.xlu0 %1746
  %v1748 = vrot.slane %v1747, 4
  %v1749 = vadd.f32 %v1747, %v1748
  %v1750 = vrot.slane %v1749, 2
  %v1751 = vadd.f32 %v1749, %v1750
  %v1752 = vrot.slane %v1751, 1
  %v1753 = vadd.f32 %v1751, %v1752
  %s1754 = vtos %v1753
  %s1755 = sadd.f32 %s1482, %s1754
  %v1756 = vadd.s32 %v976, 3
  %v1757 = vadd.s32 %v977, 3
  %v1758 = vadd.s32 %v978, 3
  %v1759 = vadd.s32 %v979, 3
  %v1760 = vadd.s32 %v980, 3
  %v1761 = vadd.s32 %v981, 3
  %v1762 = vadd.s32 %v982, 3
  %v1763 = vadd.s32 %v983, 3
  %1764 = vset.pattern.permute.xlu0 0
  %1765 = vperm.xlu0 %1764, %v1756
  %v1766 = vpop.permute.xlu0 %1765
  %1767 = vset.pattern.permute.xlu0 0
  %1768 = vperm.xlu0 %1767, %v1757
  %v1769 = vpop.permute.xlu0 %1768
  %1770 = vset.pattern.permute.xlu0 0
  %1771 = vperm.xlu0 %1770, %v1758
  %v1772 = vpop.permute.xlu0 %1771
  %1773 = vset.pattern.permute.xlu0 0
  %1774 = vperm.xlu0 %1773, %v1759
  %v1775 = vpop.permute.xlu0 %1774
  %1776 = vset.pattern.permute.xlu0 0
  %1777 = vperm.xlu0 %1776, %v1760
  %v1778 = vpop.permute.xlu0 %1777
  %1779 = vset.pattern.permute.xlu0 0
  %1780 = vperm.xlu0 %1779, %v1761
  %v1781 = vpop.permute.xlu0 %1780
  %1782 = vset.pattern.permute.xlu0 0
  %1783 = vperm.xlu0 %1782, %v1762
  %v1784 = vpop.permute.xlu0 %1783
  %1785 = vset.pattern.permute.xlu0 0
  %1786 = vperm.xlu0 %1785, %v1763
  %v1787 = vpop.permute.xlu0 %1786
  %vm1788 = vcmp.eq.s32.totalorder %v633, %v1766
  %vm1789 = vcmp.eq.s32.totalorder %v633, %v1769
  %vm1790 = vcmp.eq.s32.totalorder %v633, %v1772
  %vm1791 = vcmp.eq.s32.totalorder %v633, %v1775
  %vm1792 = vcmp.eq.s32.totalorder %v633, %v1778
  %vm1793 = vcmp.eq.s32.totalorder %v633, %v1781
  %vm1794 = vcmp.eq.s32.totalorder %v633, %v1784
  %vm1795 = vcmp.eq.s32.totalorder %v633, %v1787
  %v1796 = vsel %vm1788, 1, 0
  %v1797 = vsel %vm1789, 1, 0
  %v1798 = vsel %vm1790, 1, 0
  %v1799 = vsel %vm1791, 1, 0
  %v1800 = vsel %vm1792, 1, 0
  %v1801 = vsel %vm1793, 1, 0
  %v1802 = vsel %vm1794, 1, 0
  %v1803 = vsel %vm1795, 1, 0
  %v1804 = vcvt.s32.f32 %v1796
  %v1805 = vcvt.s32.f32 %v1797
  %v1806 = vcvt.s32.f32 %v1798
  %v1807 = vcvt.s32.f32 %v1799
  %v1808 = vcvt.s32.f32 %v1800
  %v1809 = vcvt.s32.f32 %v1801
  %v1810 = vcvt.s32.f32 %v1802
  %v1811 = vcvt.s32.f32 %v1803
  %v1812 = vmul.f32 %v968, %v1804
  %v1813 = vmul.f32 %v969, %v1805
  %v1814 = vmul.f32 %v970, %v1806
  %v1815 = vmul.f32 %v971, %v1807
  %v1816 = vmul.f32 %v972, %v1808
  %v1817 = vmul.f32 %v973, %v1809
  %v1818 = vmul.f32 %v974, %v1810
  %v1819 = vmul.f32 %v975, %v1811
  %v1820 = vsel %vm1040, %v1812, 0.0
  %1821 = vadd.xlane.f32.xlu0 %v1820
  %v1822 = vpop.xlane.xlu0 %1821
  %v1823 = vsel %vm1040, %v1813, 0.0
  %1824 = vadd.xlane.f32.xlu0 %v1823
  %v1825 = vpop.xlane.xlu0 %1824
  %v1826 = vsel %vm1040, %v1814, 0.0
  %1827 = vadd.xlane.f32.xlu0 %v1826
  %v1828 = vpop.xlane.xlu0 %1827
  %v1829 = vsel %vm1040, %v1815, 0.0
  %1830 = vadd.xlane.f32.xlu0 %v1829
  %v1831 = vpop.xlane.xlu0 %1830
  %v1832 = vsel %vm1040, %v1816, 0.0
  %1833 = vadd.xlane.f32.xlu0 %v1832
  %v1834 = vpop.xlane.xlu0 %1833
  %v1835 = vsel %vm1040, %v1817, 0.0
  %1836 = vadd.xlane.f32.xlu0 %v1835
  %v1837 = vpop.xlane.xlu0 %1836
  %v1838 = vsel %vm1040, %v1818, 0.0
  %1839 = vadd.xlane.f32.xlu0 %v1838
  %v1840 = vpop.xlane.xlu0 %1839
  %v1841 = vsel %vm1040, %v1819, 0.0
  %1842 = vadd.xlane.f32.xlu0 %v1841
  %v1843 = vpop.xlane.xlu0 %1842
  %v1844 = vsub.f32 %v1822, %v1065
  %v1845 = vsub.f32 %v1825, %v1066
  %v1846 = vsub.f32 %v1828, %v1067
  %v1847 = vsub.f32 %v1831, %v1068
  %v1848 = vsub.f32 %v1834, %v1069
  %v1849 = vsub.f32 %v1837, %v1070
  %v1850 = vsub.f32 %v1840, %v1071
  %v1851 = vsub.f32 %v1843, %v1072
  %1852 = vrot.lane.b32.xlu0 %v960, 3
  %v1853 = vpop.permute.xlu0 %1852
  %1854 = vrot.lane.b32.xlu0 %v961, 3
  %v1855 = vpop.permute.xlu0 %1854
  %1856 = vrot.lane.b32.xlu0 %v962, 3
  %v1857 = vpop.permute.xlu0 %1856
  %1858 = vrot.lane.b32.xlu0 %v963, 3
  %v1859 = vpop.permute.xlu0 %1858
  %1860 = vrot.lane.b32.xlu0 %v964, 3
  %v1861 = vpop.permute.xlu0 %1860
  %1862 = vrot.lane.b32.xlu0 %v965, 3
  %v1863 = vpop.permute.xlu0 %1862
  %1864 = vrot.lane.b32.xlu0 %v966, 3
  %v1865 = vpop.permute.xlu0 %1864
  %1866 = vrot.lane.b32.xlu0 %v967, 3
  %v1867 = vpop.permute.xlu0 %1866
  %v1876 = vmul.f32 %v1844, %v1853
  %v1877 = vmul.f32 %v1845, %v1855
  %v1878 = vmul.f32 %v1846, %v1857
  %v1879 = vmul.f32 %v1847, %v1859
  %v1880 = vmul.f32 %v1848, %v1861
  %v1881 = vmul.f32 %v1849, %v1863
  %v1882 = vmul.f32 %v1850, %v1865
  %v1883 = vmul.f32 %v1851, %v1867
  %v1884 = vand.u32 2147483647, %v1876
  %v1885 = vand.u32 2147483647, %v1877
  %v1886 = vand.u32 2147483647, %v1878
  %v1887 = vand.u32 2147483647, %v1879
  %v1888 = vand.u32 2147483647, %v1880
  %v1889 = vand.u32 2147483647, %v1881
  %v1890 = vand.u32 2147483647, %v1882
  %v1891 = vand.u32 2147483647, %v1883
  %vm1892 = vcmp.lt.f32.partialorder %v1884, 1.0
  %vm1893 = vcmp.lt.f32.partialorder %v1885, 1.0
  %vm1894 = vcmp.lt.f32.partialorder %v1886, 1.0
  %vm1895 = vcmp.lt.f32.partialorder %v1887, 1.0
  %vm1896 = vcmp.lt.f32.partialorder %v1888, 1.0
  %vm1897 = vcmp.lt.f32.partialorder %v1889, 1.0
  %vm1898 = vcmp.lt.f32.partialorder %v1890, 1.0
  %vm1899 = vcmp.lt.f32.partialorder %v1891, 1.0
  %v1900 = vsel %vm1892, 1, 0
  %v1901 = vsel %vm1893, 1, 0
  %v1902 = vsel %vm1894, 1, 0
  %v1903 = vsel %vm1895, 1, 0
  %v1904 = vsel %vm1896, 1, 0
  %v1905 = vsel %vm1897, 1, 0
  %v1906 = vsel %vm1898, 1, 0
  %v1907 = vsel %vm1899, 1, 0
  %v1908 = vcvt.s32.f32 %v1900
  %v1909 = vcvt.s32.f32 %v1901
  %v1910 = vcvt.s32.f32 %v1902
  %v1911 = vcvt.s32.f32 %v1903
  %v1912 = vcvt.s32.f32 %v1904
  %v1913 = vcvt.s32.f32 %v1905
  %v1914 = vcvt.s32.f32 %v1906
  %v1915 = vcvt.s32.f32 %v1907
  %v1916 = vmul.f32 %v1884, 0.5
  %v1917 = vmul.f32 %v1885, 0.5
  %v1918 = vmul.f32 %v1886, 0.5
  %v1919 = vmul.f32 %v1887, 0.5
  %v1920 = vmul.f32 %v1888, 0.5
  %v1921 = vmul.f32 %v1889, 0.5
  %v1922 = vmul.f32 %v1890, 0.5
  %v1923 = vmul.f32 %v1891, 0.5
  %v1924 = vmul.f32 %v1916, %v1884
  %v1925 = vmul.f32 %v1917, %v1885
  %v1926 = vmul.f32 %v1918, %v1886
  %v1927 = vmul.f32 %v1919, %v1887
  %v1928 = vmul.f32 %v1920, %v1888
  %v1929 = vmul.f32 %v1921, %v1889
  %v1930 = vmul.f32 %v1922, %v1890
  %v1931 = vmul.f32 %v1923, %v1891
  %v1932 = vmul.f32 %v1908, %v1924
  %v1933 = vmul.f32 %v1909, %v1925
  %v1934 = vmul.f32 %v1910, %v1926
  %v1935 = vmul.f32 %v1911, %v1927
  %v1936 = vmul.f32 %v1912, %v1928
  %v1937 = vmul.f32 %v1913, %v1929
  %v1938 = vmul.f32 %v1914, %v1930
  %v1939 = vmul.f32 %v1915, %v1931
  %v1940 = vsub.f32 1.0, %v1908
  %v1941 = vsub.f32 1.0, %v1909
  %v1942 = vsub.f32 1.0, %v1910
  %v1943 = vsub.f32 1.0, %v1911
  %v1944 = vsub.f32 1.0, %v1912
  %v1945 = vsub.f32 1.0, %v1913
  %v1946 = vsub.f32 1.0, %v1914
  %v1947 = vsub.f32 1.0, %v1915
  %v1948 = vsub.f32 %v1884, 0.5
  %v1949 = vsub.f32 %v1885, 0.5
  %v1950 = vsub.f32 %v1886, 0.5
  %v1951 = vsub.f32 %v1887, 0.5
  %v1952 = vsub.f32 %v1888, 0.5
  %v1953 = vsub.f32 %v1889, 0.5
  %v1954 = vsub.f32 %v1890, 0.5
  %v1955 = vsub.f32 %v1891, 0.5
  %v1956 = vmul.f32 %v1940, %v1948
  %v1957 = vmul.f32 %v1941, %v1949
  %v1958 = vmul.f32 %v1942, %v1950
  %v1959 = vmul.f32 %v1943, %v1951
  %v1960 = vmul.f32 %v1944, %v1952
  %v1961 = vmul.f32 %v1945, %v1953
  %v1962 = vmul.f32 %v1946, %v1954
  %v1963 = vmul.f32 %v1947, %v1955
  %v1964 = vadd.f32 %v1932, %v1956
  %v1965 = vadd.f32 %v1933, %v1957
  %v1966 = vadd.f32 %v1934, %v1958
  %v1967 = vadd.f32 %v1935, %v1959
  %v1968 = vadd.f32 %v1936, %v1960
  %v1969 = vadd.f32 %v1937, %v1961
  %v1970 = vadd.f32 %v1938, %v1962
  %v1971 = vadd.f32 %v1939, %v1963
  %1980 = vrot.lane.b32.xlu0 %v1964, 125
  %v1981 = vpop.permute.xlu0 %1980
  %1982 = vrot.lane.b32.xlu0 %v1965, 125
  %v1983 = vpop.permute.xlu0 %1982
  %1984 = vrot.lane.b32.xlu0 %v1966, 125
  %v1985 = vpop.permute.xlu0 %1984
  %1986 = vrot.lane.b32.xlu0 %v1967, 125
  %v1987 = vpop.permute.xlu0 %1986
  %1988 = vrot.lane.b32.xlu0 %v1968, 125
  %v1989 = vpop.permute.xlu0 %1988
  %1990 = vrot.lane.b32.xlu0 %v1969, 125
  %v1991 = vpop.permute.xlu0 %1990
  %1992 = vrot.lane.b32.xlu0 %v1970, 125
  %v1993 = vpop.permute.xlu0 %1992
  %1994 = vrot.lane.b32.xlu0 %v1971, 125
  %v1995 = vpop.permute.xlu0 %1994
  %v2004 = vsel %vm874, %v1981, 0.0
  %v2005 = vsel %vm874, %v1983, 0.0
  %v2006 = vadd.f32 %v2004, %v2005
  %v2007 = vsel %vm874, %v1985, 0.0
  %v2008 = vadd.f32 %v2006, %v2007
  %v2009 = vsel %vm874, %v1987, 0.0
  %v2010 = vadd.f32 %v2008, %v2009
  %v2011 = vsel %vm874, %v1989, 0.0
  %v2012 = vadd.f32 %v2010, %v2011
  %v2013 = vsel %vm874, %v1991, 0.0
  %v2014 = vadd.f32 %v2012, %v2013
  %v2015 = vsel %vm874, %v1993, 0.0
  %v2016 = vadd.f32 %v2014, %v2015
  %v2017 = vsel %vm874, %v1995, 0.0
  %v2018 = vadd.f32 %v2016, %v2017
  %2019 = vadd.xlane.f32.xlu0 %v2018
  %v2020 = vpop.xlane.xlu0 %2019
  %v2021 = vrot.slane %v2020, 4
  %v2022 = vadd.f32 %v2020, %v2021
  %v2023 = vrot.slane %v2022, 2
  %v2024 = vadd.f32 %v2022, %v2023
  %v2025 = vrot.slane %v2024, 1
  %v2026 = vadd.f32 %v2024, %v2025
  %s2027 = vtos %v2026
  %s2028 = sadd.f32 %s1755, %s2027
  %s2029 = smul.f32 %s2028, 0.015625
  %v2030 = vld [vmem:[%s7] sm:$0xff]
  %v2031 = vld [vmem:[%s7 + $0x8] sm:$0xff]
  %v2032 = vld [vmem:[%s7 + $0x10] sm:$0xff]
  %v2033 = vld [vmem:[%s7 + $0x18] sm:$0xff]
  %v2034 = vld [vmem:[%s7 + $0x20] sm:$0xff]
  %v2035 = vld [vmem:[%s7 + $0x28] sm:$0xff]
  %v2036 = vld [vmem:[%s7 + $0x30] sm:$0xff]
  %v2037 = vld [vmem:[%s7 + $0x38] sm:$0xff]
  %vm2038 = vcmask 64512
  %v2039 = vsel %vm2038, %v2030, -inf
  %2040 = vmax.xlane.f32.xlu0 %v2039
  %v2041 = vpop.xlane.xlu0 %2040
  %v2042 = vsel %vm2038, %v2031, -inf
  %2043 = vmax.xlane.f32.xlu0 %v2042
  %v2044 = vpop.xlane.xlu0 %2043
  %v2045 = vsel %vm2038, %v2032, -inf
  %2046 = vmax.xlane.f32.xlu0 %v2045
  %v2047 = vpop.xlane.xlu0 %2046
  %v2048 = vsel %vm2038, %v2033, -inf
  %2049 = vmax.xlane.f32.xlu0 %v2048
  %v2050 = vpop.xlane.xlu0 %2049
  %v2051 = vsel %vm2038, %v2034, -inf
  %2052 = vmax.xlane.f32.xlu0 %v2051
  %v2053 = vpop.xlane.xlu0 %2052
  %v2054 = vsel %vm2038, %v2035, -inf
  %2055 = vmax.xlane.f32.xlu0 %v2054
  %v2056 = vpop.xlane.xlu0 %2055
  %v2057 = vsel %vm2038, %v2036, -inf
  %2058 = vmax.xlane.f32.xlu0 %v2057
  %v2059 = vpop.xlane.xlu0 %2058
  %v2060 = vsel %vm2038, %v2037, -inf
  %2061 = vmax.xlane.f32.xlu0 %v2060
  %v2062 = vpop.xlane.xlu0 %2061
  %v2063 = vsub.f32 %v2030, %v2041
  %v2064 = vsub.f32 %v2031, %v2044
  %v2065 = vsub.f32 %v2032, %v2047
  %v2066 = vsub.f32 %v2033, %v2050
  %v2067 = vsub.f32 %v2034, %v2053
  %v2068 = vsub.f32 %v2035, %v2056
  %v2069 = vsub.f32 %v2036, %v2059
  %v2070 = vsub.f32 %v2037, %v2062
  %v2071 = vmul.f32 %v2063, 1.442695
  %v2072 = vpow.pop %v2071
  %v2073 = vmul.f32 %v2064, 1.442695
  %v2074 = vpow.pop %v2073
  %v2075 = vmul.f32 %v2065, 1.442695
  %v2076 = vpow.pop %v2075
  %v2077 = vmul.f32 %v2066, 1.442695
  %v2078 = vpow.pop %v2077
  %v2079 = vmul.f32 %v2067, 1.442695
  %v2080 = vpow.pop %v2079
  %v2081 = vmul.f32 %v2068, 1.442695
  %v2082 = vpow.pop %v2081
  %v2083 = vmul.f32 %v2069, 1.442695
  %v2084 = vpow.pop %v2083
  %v2085 = vmul.f32 %v2070, 1.442695
  %v2086 = vpow.pop %v2085
  %v2087 = vsel %vm2038, %v2072, 0.0
  %2088 = vadd.xlane.f32.xlu0 %v2087
  %v2089 = vpop.xlane.xlu0 %2088
  %v2090 = vsel %vm2038, %v2074, 0.0
  %2091 = vadd.xlane.f32.xlu0 %v2090
  %v2092 = vpop.xlane.xlu0 %2091
  %v2093 = vsel %vm2038, %v2076, 0.0
  %2094 = vadd.xlane.f32.xlu0 %v2093
  %v2095 = vpop.xlane.xlu0 %2094
  %v2096 = vsel %vm2038, %v2078, 0.0
  %2097 = vadd.xlane.f32.xlu0 %v2096
  %v2098 = vpop.xlane.xlu0 %2097
  %v2099 = vsel %vm2038, %v2080, 0.0
  %2100 = vadd.xlane.f32.xlu0 %v2099
  %v2101 = vpop.xlane.xlu0 %2100
  %v2102 = vsel %vm2038, %v2082, 0.0
  %2103 = vadd.xlane.f32.xlu0 %v2102
  %v2104 = vpop.xlane.xlu0 %2103
  %v2105 = vsel %vm2038, %v2084, 0.0
  %2106 = vadd.xlane.f32.xlu0 %v2105
  %v2107 = vpop.xlane.xlu0 %2106
  %v2108 = vsel %vm2038, %v2086, 0.0
  %2109 = vadd.xlane.f32.xlu0 %v2108
  %v2110 = vpop.xlane.xlu0 %2109
  %v2111 = vlog2.pop %v2089
  %v2112 = vmul.f32 %v2111, 0.6931472
  %v2113 = vlog2.pop %v2092
  %v2114 = vmul.f32 %v2113, 0.6931472
  %v2115 = vlog2.pop %v2095
  %v2116 = vmul.f32 %v2115, 0.6931472
  %v2117 = vlog2.pop %v2098
  %v2118 = vmul.f32 %v2117, 0.6931472
  %v2119 = vlog2.pop %v2101
  %v2120 = vmul.f32 %v2119, 0.6931472
  %v2121 = vlog2.pop %v2104
  %v2122 = vmul.f32 %v2121, 0.6931472
  %v2123 = vlog2.pop %v2107
  %v2124 = vmul.f32 %v2123, 0.6931472
  %v2125 = vlog2.pop %v2110
  %v2126 = vmul.f32 %v2125, 0.6931472
  %v2127 = vadd.f32 %v2041, %v2112
  %v2128 = vadd.f32 %v2044, %v2114
  %v2129 = vadd.f32 %v2047, %v2116
  %v2130 = vadd.f32 %v2050, %v2118
  %v2131 = vadd.f32 %v2053, %v2120
  %v2132 = vadd.f32 %v2056, %v2122
  %v2133 = vadd.f32 %v2059, %v2124
  %v2134 = vadd.f32 %v2062, %v2126
  %2135 = vset.pattern.permute.xlu0 0
  %2136 = vperm.xlu0 %2135, %v952
  %v2137 = vpop.permute.xlu0 %2136
  %2138 = vset.pattern.permute.xlu0 0
  %2139 = vperm.xlu0 %2138, %v953
  %v2140 = vpop.permute.xlu0 %2139
  %2141 = vset.pattern.permute.xlu0 0
  %2142 = vperm.xlu0 %2141, %v954
  %v2143 = vpop.permute.xlu0 %2142
  %2144 = vset.pattern.permute.xlu0 0
  %2145 = vperm.xlu0 %2144, %v955
  %v2146 = vpop.permute.xlu0 %2145
  %2147 = vset.pattern.permute.xlu0 0
  %2148 = vperm.xlu0 %2147, %v956
  %v2149 = vpop.permute.xlu0 %2148
  %2150 = vset.pattern.permute.xlu0 0
  %2151 = vperm.xlu0 %2150, %v957
  %v2152 = vpop.permute.xlu0 %2151
  %2153 = vset.pattern.permute.xlu0 0
  %2154 = vperm.xlu0 %2153, %v958
  %v2155 = vpop.permute.xlu0 %2154
  %2156 = vset.pattern.permute.xlu0 0
  %2157 = vperm.xlu0 %2156, %v959
  %v2158 = vpop.permute.xlu0 %2157
  %vm2159 = vcmp.eq.s32.totalorder %v633, %v2137
  %vm2160 = vcmp.eq.s32.totalorder %v633, %v2140
  %vm2161 = vcmp.eq.s32.totalorder %v633, %v2143
  %vm2162 = vcmp.eq.s32.totalorder %v633, %v2146
  %vm2163 = vcmp.eq.s32.totalorder %v633, %v2149
  %vm2164 = vcmp.eq.s32.totalorder %v633, %v2152
  %vm2165 = vcmp.eq.s32.totalorder %v633, %v2155
  %vm2166 = vcmp.eq.s32.totalorder %v633, %v2158
  %v2167 = vsel %vm2159, 1, 0
  %v2168 = vsel %vm2160, 1, 0
  %v2169 = vsel %vm2161, 1, 0
  %v2170 = vsel %vm2162, 1, 0
  %v2171 = vsel %vm2163, 1, 0
  %v2172 = vsel %vm2164, 1, 0
  %v2173 = vsel %vm2165, 1, 0
  %v2174 = vsel %vm2166, 1, 0
  %v2175 = vcvt.s32.f32 %v2167
  %v2176 = vcvt.s32.f32 %v2168
  %v2177 = vcvt.s32.f32 %v2169
  %v2178 = vcvt.s32.f32 %v2170
  %v2179 = vcvt.s32.f32 %v2171
  %v2180 = vcvt.s32.f32 %v2172
  %v2181 = vcvt.s32.f32 %v2173
  %v2182 = vcvt.s32.f32 %v2174
  %v2183 = vmul.f32 %v2175, %v2030
  %v2184 = vmul.f32 %v2176, %v2031
  %v2185 = vmul.f32 %v2177, %v2032
  %v2186 = vmul.f32 %v2178, %v2033
  %v2187 = vmul.f32 %v2179, %v2034
  %v2188 = vmul.f32 %v2180, %v2035
  %v2189 = vmul.f32 %v2181, %v2036
  %v2190 = vmul.f32 %v2182, %v2037
  %v2191 = vsel %vm2038, %v2183, 0.0
  %2192 = vadd.xlane.f32.xlu0 %v2191
  %v2193 = vpop.xlane.xlu0 %2192
  %v2194 = vsel %vm2038, %v2184, 0.0
  %2195 = vadd.xlane.f32.xlu0 %v2194
  %v2196 = vpop.xlane.xlu0 %2195
  %v2197 = vsel %vm2038, %v2185, 0.0
  %2198 = vadd.xlane.f32.xlu0 %v2197
  %v2199 = vpop.xlane.xlu0 %2198
  %v2200 = vsel %vm2038, %v2186, 0.0
  %2201 = vadd.xlane.f32.xlu0 %v2200
  %v2202 = vpop.xlane.xlu0 %2201
  %v2203 = vsel %vm2038, %v2187, 0.0
  %2204 = vadd.xlane.f32.xlu0 %v2203
  %v2205 = vpop.xlane.xlu0 %2204
  %v2206 = vsel %vm2038, %v2188, 0.0
  %2207 = vadd.xlane.f32.xlu0 %v2206
  %v2208 = vpop.xlane.xlu0 %2207
  %v2209 = vsel %vm2038, %v2189, 0.0
  %2210 = vadd.xlane.f32.xlu0 %v2209
  %v2211 = vpop.xlane.xlu0 %2210
  %v2212 = vsel %vm2038, %v2190, 0.0
  %2213 = vadd.xlane.f32.xlu0 %v2212
  %v2214 = vpop.xlane.xlu0 %2213
  %vm2215 = vcmp.ne.s32.totalorder %v952, 4294967295
  %vm2216 = vcmp.ne.s32.totalorder %v953, 4294967295
  %vm2217 = vcmp.ne.s32.totalorder %v954, 4294967295
  %vm2218 = vcmp.ne.s32.totalorder %v955, 4294967295
  %vm2219 = vcmp.ne.s32.totalorder %v956, 4294967295
  %vm2220 = vcmp.ne.s32.totalorder %v957, 4294967295
  %vm2221 = vcmp.ne.s32.totalorder %v958, 4294967295
  %vm2222 = vcmp.ne.s32.totalorder %v959, 4294967295
  %v2223 = vsel %vm2215, 1, 0
  %v2224 = vsel %vm2216, 1, 0
  %v2225 = vsel %vm2217, 1, 0
  %v2226 = vsel %vm2218, 1, 0
  %v2227 = vsel %vm2219, 1, 0
  %v2228 = vsel %vm2220, 1, 0
  %v2229 = vsel %vm2221, 1, 0
  %v2230 = vsel %vm2222, 1, 0
  %v2231 = vcvt.s32.f32 %v2223
  %v2232 = vcvt.s32.f32 %v2224
  %v2233 = vcvt.s32.f32 %v2225
  %v2234 = vcvt.s32.f32 %v2226
  %v2235 = vcvt.s32.f32 %v2227
  %v2236 = vcvt.s32.f32 %v2228
  %v2237 = vcvt.s32.f32 %v2229
  %v2238 = vcvt.s32.f32 %v2230
  %v2239 = vsub.f32 %v2127, %v2193
  %v2240 = vsub.f32 %v2128, %v2196
  %v2241 = vsub.f32 %v2129, %v2199
  %v2242 = vsub.f32 %v2130, %v2202
  %v2243 = vsub.f32 %v2131, %v2205
  %v2244 = vsub.f32 %v2132, %v2208
  %v2245 = vsub.f32 %v2133, %v2211
  %v2246 = vsub.f32 %v2134, %v2214
  %v2247 = vmul.f32 %v2239, %v2231
  %v2248 = vmul.f32 %v2240, %v2232
  %v2249 = vmul.f32 %v2241, %v2233
  %v2250 = vmul.f32 %v2242, %v2234
  %v2251 = vmul.f32 %v2243, %v2235
  %v2252 = vmul.f32 %v2244, %v2236
  %v2253 = vmul.f32 %v2245, %v2237
  %v2254 = vmul.f32 %v2246, %v2238
  %v2255 = vsel %vm874, %v2247, 0.0
  %v2256 = vsel %vm874, %v2248, 0.0
  %v2257 = vadd.f32 %v2255, %v2256
  %v2258 = vsel %vm874, %v2249, 0.0
  %v2259 = vadd.f32 %v2257, %v2258
  %v2260 = vsel %vm874, %v2250, 0.0
  %v2261 = vadd.f32 %v2259, %v2260
  %v2262 = vsel %vm874, %v2251, 0.0
  %v2263 = vadd.f32 %v2261, %v2262
  %v2264 = vsel %vm874, %v2252, 0.0
  %v2265 = vadd.f32 %v2263, %v2264
  %v2266 = vsel %vm874, %v2253, 0.0
  %v2267 = vadd.f32 %v2265, %v2266
  %v2268 = vsel %vm874, %v2254, 0.0
  %v2269 = vadd.f32 %v2267, %v2268
  %v2270 = vrot.slane %v2269, 4
  %v2271 = vadd.f32 %v2269, %v2270
  %v2272 = vrot.slane %v2271, 2
  %v2273 = vadd.f32 %v2271, %v2272
  %v2274 = vrot.slane %v2273, 1
  %v2275 = vadd.f32 %v2273, %v2274
  %v2276 = vsel %vm874, %v2231, 0.0
  %v2277 = vsel %vm874, %v2232, 0.0
  %v2278 = vadd.f32 %v2276, %v2277
  %v2279 = vsel %vm874, %v2233, 0.0
  %v2280 = vadd.f32 %v2278, %v2279
  %v2281 = vsel %vm874, %v2234, 0.0
  %v2282 = vadd.f32 %v2280, %v2281
  %v2283 = vsel %vm874, %v2235, 0.0
  %v2284 = vadd.f32 %v2282, %v2283
  %v2285 = vsel %vm874, %v2236, 0.0
  %v2286 = vadd.f32 %v2284, %v2285
  %v2287 = vsel %vm874, %v2237, 0.0
  %v2288 = vadd.f32 %v2286, %v2287
  %v2289 = vsel %vm874, %v2238, 0.0
  %v2290 = vadd.f32 %v2288, %v2289
  %v2291 = vrot.slane %v2290, 4
  %v2292 = vadd.f32 %v2290, %v2291
  %v2293 = vrot.slane %v2292, 2
  %v2294 = vadd.f32 %v2292, %v2293
  %v2295 = vrot.slane %v2294, 1
  %v2296 = vadd.f32 %v2294, %v2295
  %v2297 = vmax.f32 %v2296, 1.0
  %v2298 = vrcp.pop %v2297
  %v2299 = vmul.f32 %v2275, %v2298
  %v2300 = vstv %s422
  %v2301 = vadd.f32 %v2300, %v951
  %v2302 = vstv %s2029
  %v2303 = vadd.f32 %v2301, %v2302
  %v2304 = vadd.f32 %v2303, %v2299
  %vm2305 = vcmp.eq.s32.totalorder %v633, 0
  %v2306 = vsel %vm2305, %v2300, 0.0
  %vm2307 = vcmp.eq.s32.totalorder %v633, 1
  %2309 = vset.pattern.permute.xlu0 0
  %2310 = vperm.xlu0 %2309, %v951
  %v2311 = vpop.permute.xlu0 %2310
  %v2313 = vsel %vm2307, %v2311, 0.0
  %v2314 = vadd.f32 %v2306, %v2313
  %vm2315 = vcmp.eq.s32.totalorder %v633, 2
  %v2316 = vsel %vm2315, %v2302, 0.0
  %v2317 = vadd.f32 %v2314, %v2316
  %vm2318 = vcmp.eq.s32.totalorder %v633, 3
  %2320 = vset.pattern.permute.xlu0 0
  %2321 = vperm.xlu0 %2320, %v2299
  %v2322 = vpop.permute.xlu0 %2321
  %v2324 = vsel %vm2318, %v2322, 0.0
  %v2325 = vadd.f32 %v2317, %v2324
  %vm2326 = vcmp.eq.s32.totalorder %v633, 4
  %2328 = vset.pattern.permute.xlu0 0
  %2329 = vperm.xlu0 %2328, %v2304
  %v2330 = vpop.permute.xlu0 %2329
  %v2332 = vsel %vm2326, %v2330, 0.0
  %v2333 = vadd.f32 %v2325, %v2332
  %2334 = vst [vmem:[%s8] sm:$0x1] %v2333
  // Predicated region
  $region34: #{trainer_forward_losses.1} parent=0 // pred_check
    _
  $region35: #{trainer_forward_losses.1} parent=0 // pred_check_branch
    %2336 = sbr.rel (0) target = $region37
  $region36: #{trainer_forward_losses.1} parent=0 // pred_region
    _
  $region37: #{trainer_forward_losses.1} parent=0 // pred_fallthru
    _
  // Predicated region
  $region38: #{trainer_forward_losses.1} parent=0 // pred_check
    _
  $region39: #{trainer_forward_losses.1} parent=0 // pred_check_branch
    %2338 = sbr.rel (0) target = $region41
  $region40: #{trainer_forward_losses.1} parent=0 // pred_region
    _
  $region41: #{trainer_forward_losses.1} parent=0 // pred_fallthru
    _

</llo_original>
